<compile_context>
chip_gen: v7x
topology: tpu7x:2x2x1
jax: 0.10.0
libtpu: 0.0.40
codegen_flags: <defaults>
</compile_context>

<pallas_src>
import math

import jax
import jax.numpy as jnp
from jax.experimental import pallas as pl
from jax.experimental.pallas import tpu as pltpu


def _round_up(x, m):
    return ((x + m - 1) // m) * m


def sage_conv_kernel(adj_ref, feat_src_ref, feat_dst_ref,
                     wself_ref, wneigh_ref, bias_ref, out_ref,
                     acc_ref, deg_ref):
    """Grid = (dst tiles [parallel], src/K tiles [arbitrary reduction]).

    acc_ref : (TM, F) f32 running neighbor-sum for this dst tile.
    deg_ref : (TM, 1) f32 running in-degree for this dst tile.
    """
    k = pl.program_id(1)

    @pl.when(k == 0)
    def _init():
        acc_ref[...] = jnp.zeros_like(acc_ref)
        deg_ref[...] = jnp.zeros_like(deg_ref)

    adj = adj_ref[...]                                   # (TM, TK) bf16, exact 0/1
    # Neighbor-sum on the MXU with an f32 accumulator (bf16 inputs halve HBM/VMEM).
    acc_ref[...] += jnp.dot(adj, feat_src_ref[...],
                            preferred_element_type=jnp.float32)
    # In-degree from the already-resident adjacency tile (cheap per-tile reduce).
    deg_ref[...] += jnp.sum(adj.astype(jnp.float32), axis=1, keepdims=True)

    @pl.when(k == pl.num_programs(1) - 1)
    def _finalize():
        # Mean aggregation. No where() needed: rows with deg==0 already have acc==0,
        # so multiplying by 1/max(deg,1) yields the correct 0 (DGL convention).
        inv_deg = pl.reciprocal(jnp.maximum(deg_ref[...], 1.0), approx=True)
        h_neigh = acc_ref[...] * inv_deg                 # (TM, F) f32
        h_self = feat_dst_ref[...]                       # (TM, F) f32
        # TODO(synk): when out_feats < F, reassociate as (adj @ (feat @ W_neigh)) to
        # shrink the aggregation width; for this layer F <= out_pad so this order wins.
        out = (jnp.dot(h_self, wself_ref[...], preferred_element_type=jnp.float32)
               + jnp.dot(h_neigh, wneigh_ref[...], preferred_element_type=jnp.float32)
               + bias_ref[...])                          # bias pre-summed in the wrapper
        out_ref[...] = out.astype(out_ref.dtype)


def sage_conv(adj, feat, w_self, w_neigh, b_self, b_neigh, *, tm=128, tk=128):
    """adj: (N, N) dense adjacency (adj[i, j]=1 iff edge j -> i);
    feat: (N, edge_feats, in_feats); W_*: (F, out_feats); b_*: (1, out_feats).
    Returns (N, out_feats)."""
    N = feat.shape[0]
    feat_flat = feat.reshape(N, -1).astype(jnp.float32)          # flatten(1)
    F = feat_flat.shape[1]
    out_feats = w_self.shape[1]

    # Lane-dense output slab and tile-aligned node counts.
    OP = _round_up(out_feats, 128)
    Nm = _round_up(N, tm)            # dst (row) padding
    Nk = _round_up(N, tk)            # src (K)  padding

    # bf16 adjacency / src features feed the MXU aggregation (0/1 adj is exact);
    # f32 dst features keep the self path and projections in full precision.
    adj_p = jnp.zeros((Nm, Nk), jnp.bfloat16).at[:N, :N].set(adj.astype(jnp.bfloat16))
    feat_src = jnp.zeros((Nk, F), jnp.bfloat16).at[:N, :].set(feat_flat.astype(jnp.bfloat16))
    feat_dst = jnp.zeros((Nm, F), jnp.float32).at[:N, :].set(feat_flat)

    wself_p = jnp.zeros((F, OP), jnp.float32).at[:, :out_feats].set(w_self.astype(jnp.float32))
    wneigh_p = jnp.zeros((F, OP), jnp.float32).at[:, :out_feats].set(w_neigh.astype(jnp.float32))
    bias_p = jnp.zeros((1, OP), jnp.float32).at[:, :out_feats].set(
        (b_self + b_neigh).reshape(1, -1).astype(jnp.float32))

    grid = (Nm // tm, Nk // tk)

    cost = pl.CostEstimate(
        flops=2 * Nm * Nk * F + 2 * 2 * Nm * F * OP,
        transcendentals=Nm,
        bytes_accessed=(2 * Nm * Nk + 2 * Nk * F + 4 * Nm * F
                        + 2 * 4 * F * OP + 4 * OP + 4 * Nm * OP),
    )

    out_p = pl.pallas_call(
        sage_conv_kernel,
        out_shape=jax.ShapeDtypeStruct((Nm, OP), jnp.float32),
        grid_spec=pltpu.PrefetchScalarGridSpec(
            num_scalar_prefetch=0,
            grid=grid,
            in_specs=[
                pl.BlockSpec((tm, tk), lambda i, k: (i, k)),   # adj tile (bf16)
                pl.BlockSpec((tk, F), lambda i, k: (k, 0)),    # src feats, K-tiled (bf16)
                pl.BlockSpec((tm, F), lambda i, k: (i, 0)),    # dst feats, resident over K
                pl.BlockSpec((F, OP), lambda i, k: (0, 0)),    # W_self  (VMEM-resident)
                pl.BlockSpec((F, OP), lambda i, k: (0, 0)),    # W_neigh (VMEM-resident)
                pl.BlockSpec((1, OP), lambda i, k: (0, 0)),    # pre-summed bias
            ],
            out_specs=pl.BlockSpec((tm, OP), lambda i, k: (i, 0)),
            scratch_shapes=[pltpu.VMEM((tm, F), jnp.float32),   # neighbor-sum accumulator
                            pltpu.VMEM((tm, 1), jnp.float32)],  # in-degree accumulator
        ),
        compiler_params=pltpu.CompilerParams(
            dimension_semantics=("parallel", "arbitrary"),     # dst axis shards across TCs (v7x)
            vmem_limit_bytes=48 * 1024 * 1024,                 # safe on v7x 64 MiB VMEM
        ),
        cost_estimate=cost,
    )(adj_p, feat_src, feat_dst, wself_p, wneigh_p, bias_p)

    return out_p[:N, :out_feats]


def xavier_uniform(key, fan_in, fan_out, gain):
    # PyTorch xavier_uniform_ on a weight of shape (out, in): bound = gain*sqrt(6/(in+out)).
    bound = gain * math.sqrt(6.0 / (fan_in + fan_out))
    return jax.random.uniform(key, (fan_in, fan_out), jnp.float32, -bound, bound)


def linear_bias_init(key, fan_in, out_feats):
    # nn.Linear default bias init: U(-1/sqrt(fan_in), 1/sqrt(fan_in)).
    bound = 1.0 / math.sqrt(fan_in)
    return jax.random.uniform(key, (1, out_feats), jnp.float32, -bound, bound)


if __name__ == "__main__":
    # Small deterministic setup consistent with the module:
    #   in_feats=8, out_feats=32, edge_feats=2, N=200 nodes, aggregator='mean'.
    # N=200 is not a tile multiple, so the wrapper's padding path is exercised.
    N, in_feats, edge_feats, out_feats = 200, 8, 2, 32
    F = in_feats * edge_feats
    gain = math.sqrt(2.0)  # nn.init.calculate_gain('relu')

    key = jax.random.PRNGKey(0)
    k_feat, k_adj, k_ws, k_wn, k_bs, k_bn = jax.random.split(key, 6)

    feat = jax.random.normal(k_feat, (N, edge_feats, in_feats), jnp.float32)
    # Random directed graph: ~30% edge density; force one zero-in-degree node.
    adj = (jax.random.uniform(k_adj, (N, N)) < 0.3).astype(jnp.float32)
    adj = adj.at[5, :].set(0.0)

    w_self = xavier_uniform(k_ws, F, out_feats, gain)
    w_neigh = xavier_uniform(k_wn, F, out_feats, gain)
    b_self = linear_bias_init(k_bs, F, out_feats)
    b_neigh = linear_bias_init(k_bn, F, out_feats)

    out = sage_conv(adj, feat, w_self, w_neigh, b_self, b_neigh)
    out = jax.block_until_ready(out)
    assert out.shape == (N, out_feats)

    # Pure-JAX reference mirroring the kernel's bf16 aggregation inputs
    # (0/1 adjacency is exact in bf16; feat rounding matches the kernel bit-for-bit,
    #  so the only residual difference is the approx reciprocal).
    feat_flat = feat.reshape(N, -1)
    neigh_sum = jnp.dot(adj.astype(jnp.bfloat16), feat_flat.astype(jnp.bfloat16),
                        preferred_element_type=jnp.float32)
    deg = adj.sum(axis=1, keepdims=True)
    h_neigh_ref = neigh_sum / jnp.maximum(deg, 1.0)   # rows with deg==0 are already 0
    ref = feat_flat @ w_self + b_self + h_neigh_ref @ w_neigh + b_neigh
    assert jnp.allclose(out, ref, atol=5e-2, rtol=5e-2), float(jnp.max(jnp.abs(out - ref)))

    # TODO(synk): 'pool'/'lstm'/'gcn' aggregators and the edge-weight ('a') path are not
    # kernelized; only the default 'mean' aggregator without edge weights is implemented.
    print("KERNEL_OK")
</pallas_src>

<mosaic_0001>
module attributes {stable_mosaic.version = 11 : i64} {
  func.func @sage_conv_kernel(%arg0: i32, %arg1: i32, %arg2: memref<128x128xbf16, #tpu.memory_space<vmem>>, %arg3: memref<128x16xbf16, #tpu.memory_space<vmem>>, %arg4: memref<128x16xf32, #tpu.memory_space<vmem>>, %arg5: memref<16x128xf32, #tpu.memory_space<vmem>>, %arg6: memref<16x128xf32, #tpu.memory_space<vmem>>, %arg7: memref<1x128xf32, #tpu.memory_space<vmem>>, %arg8: memref<128x128xf32, #tpu.memory_space<vmem>>, %arg9: memref<128x16xf32, #tpu.memory_space<vmem>>, %arg10: memref<128x1xf32, #tpu.memory_space<vmem>>) attributes {dimension_semantics = [#tpu.dimension_semantics<parallel>, #tpu.dimension_semantics<arbitrary>], iteration_bounds = array<i64: 2, 2>, scalar_prefetch = 0 : i64, scratch_operands = 2 : i64, tpu.core_type = #tpu.core_type<tc>, window_params = [{transform_indices = @transform_0, window_bounds = array<i64: 128, 128>}, {transform_indices = @transform_1, window_bounds = array<i64: 128, 16>}, {transform_indices = @transform_2, window_bounds = array<i64: 128, 16>}, {pipeline_mode = #tpu.pipeline_mode<synchronous>, transform_indices = @transform_3, window_bounds = array<i64: 16, 128>}, {pipeline_mode = #tpu.pipeline_mode<synchronous>, transform_indices = @transform_4, window_bounds = array<i64: 16, 128>}, {pipeline_mode = #tpu.pipeline_mode<synchronous>, transform_indices = @transform_5, window_bounds = array<i64: 1, 128>}, {transform_indices = @transform_6, window_bounds = array<i64: 128, 128>}]} {
    %c0_i32 = arith.constant 0 : i32
    %0 = arith.cmpi eq, %arg1, %c0_i32 : i32
    %1 = arith.extui %0 : i1 to i32
    %c0_i32_0 = arith.constant 0 : i32
    %2 = arith.cmpi ne, %1, %c0_i32_0 : i32
    scf.if %2 {
      %cst_14 = arith.constant 0.000000e+00 : f32
      %18 = vector.broadcast %cst_14 : f32 to vector<128x16xf32>
      %c0_15 = arith.constant 0 : index
      %c0_16 = arith.constant 0 : index
      %19 = vector.load %arg9[%c0_15, %c0_16] : memref<128x16xf32, #tpu.memory_space<vmem>>, vector<128x16xf32>
      tpu.vector_store %arg9[%c0_15, %c0_16], %18 {strides = array<i32>} : memref<128x16xf32, #tpu.memory_space<vmem>>, vector<128x16xf32>,
      %cst_17 = arith.constant 0.000000e+00 : f32
      %20 = vector.broadcast %cst_17 : f32 to vector<128x1xf32>
      %c0_18 = arith.constant 0 : index
      %c0_19 = arith.constant 0 : index
      %21 = vector.load %arg10[%c0_18, %c0_19] : memref<128x1xf32, #tpu.memory_space<vmem>>, vector<128x1xf32>
      tpu.vector_store %arg10[%c0_18, %c0_19], %20 {strides = array<i32>} : memref<128x1xf32, #tpu.memory_space<vmem>>, vector<128x1xf32>,
    } else {
    }
    %c0 = arith.constant 0 : index
    %c0_1 = arith.constant 0 : index
    %3 = vector.load %arg2[%c0, %c0_1] : memref<128x128xbf16, #tpu.memory_space<vmem>>, vector<128x128xbf16>
    %c0_2 = arith.constant 0 : index
    %c0_3 = arith.constant 0 : index
    %4 = vector.load %arg9[%c0_2, %c0_3] : memref<128x16xf32, #tpu.memory_space<vmem>>, vector<128x16xf32>
    %c0_4 = arith.constant 0 : index
    %c0_5 = arith.constant 0 : index
    %5 = vector.load %arg3[%c0_4, %c0_5] : memref<128x16xbf16, #tpu.memory_space<vmem>>, vector<128x16xbf16>
    %cst = arith.constant dense<0.000000e+00> : vector<128x16xf32>
    %6 = tpu.matmul %3, %5, %cst {dimension_numbers = #tpu.dot_dimension_numbers<[1], [0], [0], [1], [0, 0, 1, 1], [], []>} : vector<128x128xbf16>, vector<128x16xbf16>, vector<128x16xf32> -> vector<128x16xf32>
    %7 = arith.addf %4, %6 : vector<128x16xf32>
    %c0_6 = arith.constant 0 : index
    %c0_7 = arith.constant 0 : index
    %8 = vector.load %arg9[%c0_6, %c0_7] : memref<128x16xf32, #tpu.memory_space<vmem>>, vector<128x16xf32>
    tpu.vector_store %arg9[%c0_6, %c0_7], %7 {strides = array<i32>} : memref<128x16xf32, #tpu.memory_space<vmem>>, vector<128x16xf32>,
    %c0_8 = arith.constant 0 : index
    %c0_9 = arith.constant 0 : index
    %9 = vector.load %arg10[%c0_8, %c0_9] : memref<128x1xf32, #tpu.memory_space<vmem>>, vector<128x1xf32>
    %10 = arith.extf %3 : vector<128x128xbf16> to vector<128x128xf32>
    %cst_10 = arith.constant dense<0.000000e+00> : vector<128xf32>
    %11 = vector.multi_reduction <add>, %10, %cst_10 [1] : vector<128x128xf32> to vector<128xf32>
    %12 = vector.shape_cast %11 : vector<128xf32> to vector<128x1xf32>
    %13 = arith.addf %9, %12 : vector<128x1xf32>
    %c0_11 = arith.constant 0 : index
    %c0_12 = arith.constant 0 : index
    %14 = vector.load %arg10[%c0_11, %c0_12] : memref<128x1xf32, #tpu.memory_space<vmem>>, vector<128x1xf32>
    tpu.vector_store %arg10[%c0_11, %c0_12], %13 {strides = array<i32>} : memref<128x1xf32, #tpu.memory_space<vmem>>, vector<128x1xf32>,
    %c1_i32 = arith.constant 1 : i32
    %15 = arith.cmpi eq, %arg1, %c1_i32 : i32
    %16 = arith.extui %15 : i1 to i32
    %c0_i32_13 = arith.constant 0 : i32
    %17 = arith.cmpi ne, %16, %c0_i32_13 : i32
    scf.if %17 {
      %c0_14 = arith.constant 0 : index
      %c0_15 = arith.constant 0 : index
      %18 = vector.load %arg10[%c0_14, %c0_15] : memref<128x1xf32, #tpu.memory_space<vmem>>, vector<128x1xf32>
      %cst_16 = arith.constant 1.000000e+00 : f32
      %19 = vector.broadcast %cst_16 : f32 to vector<128x1xf32>
      %20 = arith.maximumf %18, %19 : vector<128x1xf32>
      %21 = tpu.reciprocal %20 {approx = true} : vector<128x1xf32> -> vector<128x1xf32>
      %c0_17 = arith.constant 0 : index
      %c0_18 = arith.constant 0 : index
      %22 = vector.load %arg9[%c0_17, %c0_18] : memref<128x16xf32, #tpu.memory_space<vmem>>, vector<128x16xf32>
      %23 = vector.broadcast %21 : vector<128x1xf32> to vector<128x16xf32>
      %24 = arith.mulf %22, %23 : vector<128x16xf32>
      %c0_19 = arith.constant 0 : index
      %c0_20 = arith.constant 0 : index
      %25 = vector.load %arg4[%c0_19, %c0_20] : memref<128x16xf32, #tpu.memory_space<vmem>>, vector<128x16xf32>
      %c0_21 = arith.constant 0 : index
      %c0_22 = arith.constant 0 : index
      %26 = vector.load %arg5[%c0_21, %c0_22] : memref<16x128xf32, #tpu.memory_space<vmem>>, vector<16x128xf32>
      %cst_23 = arith.constant dense<0.000000e+00> : vector<128x128xf32>
      %27 = tpu.matmul %25, %26, %cst_23 {dimension_numbers = #tpu.dot_dimension_numbers<[1], [0], [0], [1], [0, 0, 1, 1], [], []>} : vector<128x16xf32>, vector<16x128xf32>, vector<128x128xf32> -> vector<128x128xf32>
      %c0_24 = arith.constant 0 : index
      %c0_25 = arith.constant 0 : index
      %28 = vector.load %arg6[%c0_24, %c0_25] : memref<16x128xf32, #tpu.memory_space<vmem>>, vector<16x128xf32>
      %cst_26 = arith.constant dense<0.000000e+00> : vector<128x128xf32>
      %29 = tpu.matmul %24, %28, %cst_26 {dimension_numbers = #tpu.dot_dimension_numbers<[1], [0], [0], [1], [0, 0, 1, 1], [], []>} : vector<128x16xf32>, vector<16x128xf32>, vector<128x128xf32> -> vector<128x128xf32>
      %30 = arith.addf %27, %29 : vector<128x128xf32>
      %c0_27 = arith.constant 0 : index
      %c0_28 = arith.constant 0 : index
      %31 = vector.load %arg7[%c0_27, %c0_28] : memref<1x128xf32, #tpu.memory_space<vmem>>, vector<1x128xf32>
      %32 = vector.broadcast %31 : vector<1x128xf32> to vector<128x128xf32>
      %33 = arith.addf %30, %32 : vector<128x128xf32>
      %c0_29 = arith.constant 0 : index
      %c0_30 = arith.constant 0 : index
      %34 = vector.load %arg8[%c0_29, %c0_30] : memref<128x128xf32, #tpu.memory_space<vmem>>, vector<128x128xf32>
      tpu.vector_store %arg8[%c0_29, %c0_30], %33 {strides = array<i32>} : memref<128x128xf32, #tpu.memory_space<vmem>>, vector<128x128xf32>,
    } else {
    }
    return
  }
  func.func @transform_0(%arg0: i32, %arg1: i32) -> (i32, i32) {
    %c0_i32 = arith.constant 0 : i32
    return %arg0, %arg1 : i32, i32
  }
  func.func @transform_1(%arg0: i32, %arg1: i32) -> (i32, i32) {
    %c0_i32 = arith.constant 0 : i32
    %c0_i32_0 = arith.constant 0 : i32
    return %arg1, %c0_i32 : i32, i32
  }
  func.func @transform_2(%arg0: i32, %arg1: i32) -> (i32, i32) {
    %c0_i32 = arith.constant 0 : i32
    %c0_i32_0 = arith.constant 0 : i32
    return %arg0, %c0_i32 : i32, i32
  }
  func.func @transform_3(%arg0: i32, %arg1: i32) -> (i32, i32) {
    %c0_i32 = arith.constant 0 : i32
    %c0_i32_0 = arith.constant 0 : i32
    %c0_i32_1 = arith.constant 0 : i32
    return %c0_i32, %c0_i32_0 : i32, i32
  }
  func.func @transform_4(%arg0: i32, %arg1: i32) -> (i32, i32) {
    %c0_i32 = arith.constant 0 : i32
    %c0_i32_0 = arith.constant 0 : i32
    %c0_i32_1 = arith.constant 0 : i32
    return %c0_i32, %c0_i32_0 : i32, i32
  }
  func.func @transform_5(%arg0: i32, %arg1: i32) -> (i32, i32) {
    %c0_i32 = arith.constant 0 : i32
    %c0_i32_0 = arith.constant 0 : i32
    %c0_i32_1 = arith.constant 0 : i32
    return %c0_i32, %c0_i32_0 : i32, i32
  }
  func.func @transform_6(%arg0: i32, %arg1: i32) -> (i32, i32) {
    %c0_i32 = arith.constant 0 : i32
    %c0_i32_0 = arith.constant 0 : i32
    return %arg0, %c0_i32 : i32, i32
  }
}

</mosaic_0001>

<llo_original>
// kernel: tpu_custom_call.1
$region0: #{tpu_custom_call.1}
  #allocation0 [shape = 'u32[]', space=smem, size = 0x4, offset = 0x4, fixed_abs, tag = 'smem constant byte address 0x4 - core index']
  #allocation1 [shape = 'u32[144,128]{1,0:T(1,128)}', space=vmem, size = 0x12000, scoped, tag = 'internal scratch']
  #allocation2 [shape = 'f32[128,16]{1,0:T(8,128)}', space=vmem, size = 0x10000, scoped, tag = 'scratch operand']
  #allocation3 [shape = 'f32[128,1]{1,0:T(8,128)}', space=vmem, size = 0x10000, scoped, tag = 'scratch operand']
  %s0 = inlined_call_operand.vmem [shape: bf16[256,256], index: 0, kind: input, shape index: {}]
  %s1 = inlined_call_operand.vmem [shape: bf16[256,16], index: 1, kind: input, shape index: {}]
  %s2 = inlined_call_operand.vmem [shape: f32[256,16], index: 2, kind: input, shape index: {}]
  %s3 = inlined_call_operand.vmem [shape: f32[16,128], index: 3, kind: input, shape index: {}]
  %s4 = inlined_call_operand.vmem [shape: f32[16,128], index: 4, kind: input, shape index: {}]
  %s5 = inlined_call_operand.vmem [shape: f32[1,128], index: 5, kind: input, shape index: {}]
  %s6 = inlined_call_operand.hbm [shape: f32[256,128], index: 6, kind: output, shape index: {}]
  %s7 = sld [smem:[#allocation0]]
  $region106: #{tpu_custom_call.1} parent=0
    _
  %s9 = ssub.s32 1, %s7
  %s10 = scalar_select 0, %s9, %s7
  $region1: #{tpu_custom_call.1} parent=0
    #allocation4 [shape = 'u8[65536]{0}', space=vmem, size = 0x10000, scoped, tag = 'input window, operand 0']
    #allocation5 [shape = 'u8[131072]{0}', space=vmem, size = 0x20000, scoped, tag = 'output window, operand 0']
    #allocation6 [shape = 's32[2]{0}', space=sflag, size = 0x8, scoped, tag = 'scoped memory for tpu_custom_call.1']
    %11 = vsyncpa [#allocation6], 0
    %s12 = scalar_lea.sflag [#allocation6], 1
    %13 = vsyncpa %s12, 0
    loop: start=0, step=1, limit=6
    $region2: #{tpu_custom_call.1} parent=1 // loop_pre_header
      _
    $region3: #{tpu_custom_call.1} parent=1 // loop_header
      %s15 = sphi 0, %s19
      %p16 = scmp.ge.s32.totalorder %s15, 6
      %s22 = sphi 0, %s34
      %s23 = sphi 0, %s30
      %s24 = sphi 0, %s22
      %s25 = sphi 0, %s23
      %s26 = sphi 0, %s24
      %s27 = sphi 0, %s25
      %s39 = sphi 0, %s41
      %s42 = sphi 0, %s39
      %s43 = sphi 0, %s42
      %s59 = sphi 0, %s43
      %s65 = sphi 0, %s67
      %s68 = sphi 0, %s65
      %s69 = sphi 0, %s68
      %s85 = sphi 0, %s69
      %s91 = sphi 0, %s93
      %s94 = sphi 0, %s91
      %s95 = sphi 0, %s94
      %s111 = sphi 0, %s95
      %s115 = sphi 0, %s115
      %s117 = sphi 0, %s115
      %s118 = sphi 0, %s117
      %s132 = sphi 0, %s118
      %s136 = sphi 0, %s136
      %s138 = sphi 0, %s136
      %s139 = sphi 0, %s138
      %s153 = sphi 0, %s139
      %s157 = sphi 0, %s157
      %s159 = sphi 0, %s157
      %s160 = sphi 0, %s159
      %s174 = sphi 0, %s160
      %s180 = sphi 0, %s182
      %s183 = sphi 0, %s180
      %s184 = sphi 0, %s183
      %s200 = sphi 0, %s184
    $region4: #{tpu_custom_call.1} parent=1 // loop_header_branch
      %18 = sbr.rel (%p16) target = $region8
    $region5: #{tpu_custom_call.1} parent=1 // loop_body
      %s20 = ssub.s32 %s15, 1
      %s21 = ssub.s32 %s15, 2
      %s28 = sadd.s32 1, %s23
      %p29 = scmp.ge.s32.totalorder %s28, 2
      %s30 = scalar_select %p29, 0, %s28
      %s31 = sadd.s32 1, %s22
      %s32 = scalar_select %p29, %s31, %s22
      %p33 = scmp.ge.s32.totalorder %s32, 2
      %s34 = scalar_select %p33, 0, %s32
      %s35 = ssub.s32 %s22, %s34
      %s36 = ssub.s32 %s23, %s30
      %s37 = sor.u32 %s35, %s36
      %p38 = scmp.eq.s32.totalorder %s37, 0
      %s40 = sadd.s32 %s39, 1
      %s41 = scalar_select %p38, %s39, %s40
      %p44 = pneg %p38
      %p45 = scmp.eq.s32.totalorder %s15, 3
      %p46 = por %p44, %p45
      %p47 = scmp.ne.s32.totalorder %s39, %s42
      %p48 = scmp.eq.s32.totalorder %s15, 0
      %p49 = por %p47, %p48
      %p50 = scmp.ne.s32.totalorder %s39, %s42
      %p51 = scmp.eq.s32.totalorder %s20, 3
      %p52 = por %p50, %p51
      %p53 = scmp.ne.s32.totalorder %s42, %s43
      %p54 = scmp.eq.s32.totalorder %s20, 0
      %p55 = por %p53, %p54
      %p56 = scmp.ne.s32.totalorder %s42, %s43
      %p57 = scmp.eq.s32.totalorder %s21, 3
      %p58 = por %p56, %p57
      %p60 = scmp.ne.s32.totalorder %s43, %s59
      %p61 = scmp.eq.s32.totalorder %s21, 0
      %p62 = por %p60, %p61
      %s63 = ssub.s32 %s23, %s30
      %p64 = scmp.eq.s32.totalorder %s63, 0
      %s66 = sadd.s32 %s65, 1
      %s67 = scalar_select %p64, %s65, %s66
      %p70 = pneg %p64
      %p71 = scmp.eq.s32.totalorder %s15, 3
      %p72 = por %p70, %p71
      %p73 = scmp.ne.s32.totalorder %s65, %s68
      %p74 = scmp.eq.s32.totalorder %s15, 0
      %p75 = por %p73, %p74
      %p76 = scmp.ne.s32.totalorder %s65, %s68
      %p77 = scmp.eq.s32.totalorder %s20, 3
      %p78 = por %p76, %p77
      %p79 = scmp.ne.s32.totalorder %s68, %s69
      %p80 = scmp.eq.s32.totalorder %s20, 0
      %p81 = por %p79, %p80
      %p82 = scmp.ne.s32.totalorder %s68, %s69
      %p83 = scmp.eq.s32.totalorder %s21, 3
      %p84 = por %p82, %p83
      %p86 = scmp.ne.s32.totalorder %s69, %s85
      %p87 = scmp.eq.s32.totalorder %s21, 0
      %p88 = por %p86, %p87
      %s89 = ssub.s32 %s22, %s34
      %p90 = scmp.eq.s32.totalorder %s89, 0
      %s92 = sadd.s32 %s91, 1
      %s93 = scalar_select %p90, %s91, %s92
      %p96 = pneg %p90
      %p97 = scmp.eq.s32.totalorder %s15, 3
      %p98 = por %p96, %p97
      %p99 = scmp.ne.s32.totalorder %s91, %s94
      %p100 = scmp.eq.s32.totalorder %s15, 0
      %p101 = por %p99, %p100
      %p102 = scmp.ne.s32.totalorder %s91, %s94
      %p103 = scmp.eq.s32.totalorder %s20, 3
      %p104 = por %p102, %p103
      %p105 = scmp.ne.s32.totalorder %s94, %s95
      %p106 = scmp.eq.s32.totalorder %s20, 0
      %p107 = por %p105, %p106
      %p108 = scmp.ne.s32.totalorder %s94, %s95
      %p109 = scmp.eq.s32.totalorder %s21, 3
      %p110 = por %p108, %p109
      %p112 = scmp.ne.s32.totalorder %s95, %s111
      %p113 = scmp.eq.s32.totalorder %s21, 0
      %p114 = por %p112, %p113
      %s116 = sadd.s32 %s115, 1
      %p119 = scmp.eq.s32.totalorder %s15, 3
      %p120 = scmp.ne.s32.totalorder %s115, %s117
      %p121 = scmp.eq.s32.totalorder %s15, 0
      %p122 = por %p120, %p121
      %p123 = scmp.ne.s32.totalorder %s115, %s117
      %p124 = scmp.eq.s32.totalorder %s20, 3
      %p125 = por %p123, %p124
      %p126 = scmp.ne.s32.totalorder %s117, %s118
      %p127 = scmp.eq.s32.totalorder %s20, 0
      %p128 = por %p126, %p127
      %p129 = scmp.ne.s32.totalorder %s117, %s118
      %p130 = scmp.eq.s32.totalorder %s21, 3
      %p131 = por %p129, %p130
      %p133 = scmp.ne.s32.totalorder %s118, %s132
      %p134 = scmp.eq.s32.totalorder %s21, 0
      %p135 = por %p133, %p134
      %s137 = sadd.s32 %s136, 1
      %p140 = scmp.eq.s32.totalorder %s15, 3
      %p141 = scmp.ne.s32.totalorder %s136, %s138
      %p142 = scmp.eq.s32.totalorder %s15, 0
      %p143 = por %p141, %p142
      %p144 = scmp.ne.s32.totalorder %s136, %s138
      %p145 = scmp.eq.s32.totalorder %s20, 3
      %p146 = por %p144, %p145
      %p147 = scmp.ne.s32.totalorder %s138, %s139
      %p148 = scmp.eq.s32.totalorder %s20, 0
      %p149 = por %p147, %p148
      %p150 = scmp.ne.s32.totalorder %s138, %s139
      %p151 = scmp.eq.s32.totalorder %s21, 3
      %p152 = por %p150, %p151
      %p154 = scmp.ne.s32.totalorder %s139, %s153
      %p155 = scmp.eq.s32.totalorder %s21, 0
      %p156 = por %p154, %p155
      %s158 = sadd.s32 %s157, 1
      %p161 = scmp.eq.s32.totalorder %s15, 3
      %p162 = scmp.ne.s32.totalorder %s157, %s159
      %p163 = scmp.eq.s32.totalorder %s15, 0
      %p164 = por %p162, %p163
      %p165 = scmp.ne.s32.totalorder %s157, %s159
      %p166 = scmp.eq.s32.totalorder %s20, 3
      %p167 = por %p165, %p166
      %p168 = scmp.ne.s32.totalorder %s159, %s160
      %p169 = scmp.eq.s32.totalorder %s20, 0
      %p170 = por %p168, %p169
      %p171 = scmp.ne.s32.totalorder %s159, %s160
      %p172 = scmp.eq.s32.totalorder %s21, 3
      %p173 = por %p171, %p172
      %p175 = scmp.ne.s32.totalorder %s160, %s174
      %p176 = scmp.eq.s32.totalorder %s21, 0
      %p177 = por %p175, %p176
      %s178 = ssub.s32 %s22, %s34
      %p179 = scmp.eq.s32.totalorder %s178, 0
      %s181 = sadd.s32 %s180, 1
      %s182 = scalar_select %p179, %s180, %s181
      %p185 = pneg %p179
      %p186 = scmp.eq.s32.totalorder %s15, 3
      %p187 = por %p185, %p186
      %p188 = scmp.ne.s32.totalorder %s180, %s183
      %p189 = scmp.eq.s32.totalorder %s15, 0
      %p190 = por %p188, %p189
      %p191 = scmp.ne.s32.totalorder %s180, %s183
      %p192 = scmp.eq.s32.totalorder %s20, 3
      %p193 = por %p191, %p192
      %p194 = scmp.ne.s32.totalorder %s183, %s184
      %p195 = scmp.eq.s32.totalorder %s20, 0
      %p196 = por %p194, %p195
      %p197 = scmp.ne.s32.totalorder %s183, %s184
      %p198 = scmp.eq.s32.totalorder %s21, 3
      %p199 = por %p197, %p198
      %p201 = scmp.ne.s32.totalorder %s184, %s200
      %p202 = scmp.eq.s32.totalorder %s21, 0
      %p203 = por %p201, %p202
      %p204 = scmp.le.s32.totalorder 1, %s15
      %p205 = scmp.lt.s32.totalorder %s15, 5
      %p206 = pnand %p204, %p205
      %p207 = pneg %p206
      // Predicated region
      $region9: #{tpu_custom_call.1} parent=5 // pred_check
        _
      $region10: #{tpu_custom_call.1} parent=5 // pred_check_branch
        %209 = sbr.rel (%p206) target = $region12
      $region11: #{tpu_custom_call.1} parent=5 // pred_region
        %s210 = ssub.s32 %s15, 1
        // Predicated region
        $region13: #{tpu_custom_call.1} parent=11 // pred_check
          %p211 = pneg %p128
        $region14: #{tpu_custom_call.1} parent=11 // pred_check_branch
          %213 = sbr.rel (%p211) target = $region16
        $region15: #{tpu_custom_call.1} parent=11 // pred_region
          _
        $region16: #{tpu_custom_call.1} parent=11 // pred_fallthru
          _
        // Predicated region
        $region17: #{tpu_custom_call.1} parent=11 // pred_check
          %p214 = pneg %p149
        $region18: #{tpu_custom_call.1} parent=11 // pred_check_branch
          %216 = sbr.rel (%p214) target = $region20
        $region19: #{tpu_custom_call.1} parent=11 // pred_region
          _
        $region20: #{tpu_custom_call.1} parent=11 // pred_fallthru
          _
        // Predicated region
        $region21: #{tpu_custom_call.1} parent=11 // pred_check
          %p217 = pneg %p170
        $region22: #{tpu_custom_call.1} parent=11 // pred_check_branch
          %219 = sbr.rel (%p217) target = $region24
        $region23: #{tpu_custom_call.1} parent=11 // pred_region
          _
        $region24: #{tpu_custom_call.1} parent=11 // pred_fallthru
          _
      $region12: #{tpu_custom_call.1} parent=5 // pred_fallthru
        _
      %p220 = scmp.lt.s32.totalorder %s15, 4
      // Predicated region
      $region25: #{tpu_custom_call.1} parent=5 // pred_check
        %p221 = pneg %p220
      $region26: #{tpu_custom_call.1} parent=5 // pred_check_branch
        %223 = sbr.rel (%p221) target = $region28
      $region27: #{tpu_custom_call.1} parent=5 // pred_region
        // Predicated region
        $region29: #{tpu_custom_call.1} parent=27 // pred_check
          %p224 = pneg %p49
        $region30: #{tpu_custom_call.1} parent=27 // pred_check_branch
          %226 = sbr.rel (%p224) target = $region32
        $region31: #{tpu_custom_call.1} parent=27 // pred_region
          %s227 = sand.u32 %s39, 1
          %s228 = sand.u32 %s39, 1
          %s229 = smul.addr %s228, 64
          %s230 = scalar_lea.vmem [#allocation4], %s229
          %s231 = smul.u32 16, %s22
          %s232 = smul.addr %s231, 2
          %s233 = sadd.s32 %s23, %s232
          %s234 = smul.addr %s233, 4
          %s235 = scalar_lea.vmem %s0, %s234
          // Predicated region
          $region33: #{tpu_custom_call.1} parent=31 // pred_check
            _
          $region34: #{tpu_custom_call.1} parent=31 // pred_check_branch
            %237 = sbr.rel (0) target = $region36
          $region35: #{tpu_custom_call.1} parent=31 // pred_region
            // Predicated region
            $region37: #{tpu_custom_call.1} parent=35 // pred_check
              _
            $region38: #{tpu_custom_call.1} parent=35 // pred_check_branch
              %239 = sbr.rel target = $region40
            $region39: #{tpu_custom_call.1} parent=35 // pred_region
              // Predicated region
              $region52: #{tpu_custom_call.1} parent=39 // pred_check
                _
              $region53: #{tpu_custom_call.1} parent=39 // pred_check_branch
                %284 = sbr.rel (0) target = $region55
              $region54: #{tpu_custom_call.1} parent=39 // pred_region
                loop: start=0, step=1, limit=1
                $region56: #{tpu_custom_call.1} parent=54 // loop_pre_header
                  _
                $region57: #{tpu_custom_call.1} parent=54 // loop_header
                  %s286 = sphi 0, %s290
                  %p287 = scmp.ge.s32.totalorder %s286, 1
                  %s291 = sphi %s235, %s235
                  %s292 = sphi %s230, %s230
                $region58: #{tpu_custom_call.1} parent=54 // loop_header_branch
                  %289 = sbr.rel (%p287) target = $region62
                $region59: #{tpu_custom_call.1} parent=54 // loop_body
                  _
                $region60: #{tpu_custom_call.1} parent=54 // loop_footer
                  %s290 = sadd.s32 1, %s286
                $region61: #{tpu_custom_call.1} parent=54 // loop_footer_branch
                  %285 = sbr.rel target = $region57
                $region62: #{tpu_custom_call.1} parent=54 // loop_exit
                  _
                loop: start=0, step=1, limit=1
                $region63: #{tpu_custom_call.1} parent=54 // loop_pre_header
                  _
                $region64: #{tpu_custom_call.1} parent=54 // loop_header
                  %s295 = sphi 0, %s299
                  %p296 = scmp.ge.s32.totalorder %s295, 1
                  %s300 = sphi %s235, %s235
                  %s301 = sphi %s230, %s230
                $region65: #{tpu_custom_call.1} parent=54 // loop_header_branch
                  %298 = sbr.rel (%p296) target = $region69
                $region66: #{tpu_custom_call.1} parent=54 // loop_body
                  %v302 = vld [vmem:[%s300] sm:$0xf]
                  %303 = vst [vmem:[%s301] sm:$0xf] %v302
                  %v304 = vld [vmem:[%s300 + $0x8] sm:$0xf]
                  %305 = vst [vmem:[%s301 + $0x4] sm:$0xf] %v304
                  %v306 = vld [vmem:[%s300 + $0x10] sm:$0xf]
                  %307 = vst [vmem:[%s301 + $0x8] sm:$0xf] %v306
                  %v308 = vld [vmem:[%s300 + $0x18] sm:$0xf]
                  %309 = vst [vmem:[%s301 + $0xc] sm:$0xf] %v308
                  %v310 = vld [vmem:[%s300 + $0x20] sm:$0xf]
                  %311 = vst [vmem:[%s301 + $0x10] sm:$0xf] %v310
                  %v312 = vld [vmem:[%s300 + $0x28] sm:$0xf]
                  %313 = vst [vmem:[%s301 + $0x14] sm:$0xf] %v312
                  %v314 = vld [vmem:[%s300 + $0x30] sm:$0xf]
                  %315 = vst [vmem:[%s301 + $0x18] sm:$0xf] %v314
                  %v316 = vld [vmem:[%s300 + $0x38] sm:$0xf]
                  %317 = vst [vmem:[%s301 + $0x1c] sm:$0xf] %v316
                  %v318 = vld [vmem:[%s300 + $0x40] sm:$0xf]
                  %319 = vst [vmem:[%s301 + $0x20] sm:$0xf] %v318
                  %v320 = vld [vmem:[%s300 + $0x48] sm:$0xf]
                  %321 = vst [vmem:[%s301 + $0x24] sm:$0xf] %v320
                  %v322 = vld [vmem:[%s300 + $0x50] sm:$0xf]
                  %323 = vst [vmem:[%s301 + $0x28] sm:$0xf] %v322
                  %v324 = vld [vmem:[%s300 + $0x58] sm:$0xf]
                  %325 = vst [vmem:[%s301 + $0x2c] sm:$0xf] %v324
                  %v326 = vld [vmem:[%s300 + $0x60] sm:$0xf]
                  %327 = vst [vmem:[%s301 + $0x30] sm:$0xf] %v326
                  %v328 = vld [vmem:[%s300 + $0x68] sm:$0xf]
                  %329 = vst [vmem:[%s301 + $0x34] sm:$0xf] %v328
                  %v330 = vld [vmem:[%s300 + $0x70] sm:$0xf]
                  %331 = vst [vmem:[%s301 + $0x38] sm:$0xf] %v330
                  %v332 = vld [vmem:[%s300 + $0x78] sm:$0xf]
                  %333 = vst [vmem:[%s301 + $0x3c] sm:$0xf] %v332
                $region67: #{tpu_custom_call.1} parent=54 // loop_footer
                  %s299 = sadd.s32 1, %s295
                $region68: #{tpu_custom_call.1} parent=54 // loop_footer_branch
                  %294 = sbr.rel target = $region64
                $region69: #{tpu_custom_call.1} parent=54 // loop_exit
                  _
              $region55: #{tpu_custom_call.1} parent=39 // pred_fallthru
                _
            $region40: #{tpu_custom_call.1} parent=35 // pred_fallthru
              _
            // Predicated region
            $region41: #{tpu_custom_call.1} parent=35 // pred_check
              _
            $region42: #{tpu_custom_call.1} parent=35 // pred_check_branch
              %241 = sbr.rel (0) target = $region44
            $region43: #{tpu_custom_call.1} parent=35 // pred_region
              loop: start=0, step=1, limit=1
              $region45: #{tpu_custom_call.1} parent=43 // loop_pre_header
                _
              $region46: #{tpu_custom_call.1} parent=43 // loop_header
                %s244 = sphi 0, %s248
                %p245 = scmp.ge.s32.totalorder %s244, 1
                %s249 = sphi %s235, %s235
                %s250 = sphi %s230, %s230
              $region47: #{tpu_custom_call.1} parent=43 // loop_header_branch
                %247 = sbr.rel (%p245) target = $region51
              $region48: #{tpu_custom_call.1} parent=43 // loop_body
                %v251 = vld [vmem:[%s249] sm:$0xf]
                %252 = vst [vmem:[%s250] sm:$0xf] %v251
                %v253 = vld [vmem:[%s249 + $0x8] sm:$0xf]
                %254 = vst [vmem:[%s250 + $0x4] sm:$0xf] %v253
                %v255 = vld [vmem:[%s249 + $0x10] sm:$0xf]
                %256 = vst [vmem:[%s250 + $0x8] sm:$0xf] %v255
                %v257 = vld [vmem:[%s249 + $0x18] sm:$0xf]
                %258 = vst [vmem:[%s250 + $0xc] sm:$0xf] %v257
                %v259 = vld [vmem:[%s249 + $0x20] sm:$0xf]
                %260 = vst [vmem:[%s250 + $0x10] sm:$0xf] %v259
                %v261 = vld [vmem:[%s249 + $0x28] sm:$0xf]
                %262 = vst [vmem:[%s250 + $0x14] sm:$0xf] %v261
                %v263 = vld [vmem:[%s249 + $0x30] sm:$0xf]
                %264 = vst [vmem:[%s250 + $0x18] sm:$0xf] %v263
                %v265 = vld [vmem:[%s249 + $0x38] sm:$0xf]
                %266 = vst [vmem:[%s250 + $0x1c] sm:$0xf] %v265
                %v267 = vld [vmem:[%s249 + $0x40] sm:$0xf]
                %268 = vst [vmem:[%s250 + $0x20] sm:$0xf] %v267
                %v269 = vld [vmem:[%s249 + $0x48] sm:$0xf]
                %270 = vst [vmem:[%s250 + $0x24] sm:$0xf] %v269
                %v271 = vld [vmem:[%s249 + $0x50] sm:$0xf]
                %272 = vst [vmem:[%s250 + $0x28] sm:$0xf] %v271
                %v273 = vld [vmem:[%s249 + $0x58] sm:$0xf]
                %274 = vst [vmem:[%s250 + $0x2c] sm:$0xf] %v273
                %v275 = vld [vmem:[%s249 + $0x60] sm:$0xf]
                %276 = vst [vmem:[%s250 + $0x30] sm:$0xf] %v275
                %v277 = vld [vmem:[%s249 + $0x68] sm:$0xf]
                %278 = vst [vmem:[%s250 + $0x34] sm:$0xf] %v277
                %v279 = vld [vmem:[%s249 + $0x70] sm:$0xf]
                %280 = vst [vmem:[%s250 + $0x38] sm:$0xf] %v279
                %v281 = vld [vmem:[%s249 + $0x78] sm:$0xf]
                %282 = vst [vmem:[%s250 + $0x3c] sm:$0xf] %v281
              $region49: #{tpu_custom_call.1} parent=43 // loop_footer
                %s248 = sadd.s32 1, %s244
              $region50: #{tpu_custom_call.1} parent=43 // loop_footer_branch
                %243 = sbr.rel target = $region46
              $region51: #{tpu_custom_call.1} parent=43 // loop_exit
                _
            $region44: #{tpu_custom_call.1} parent=35 // pred_fallthru
              _
          $region36: #{tpu_custom_call.1} parent=31 // pred_fallthru
            _
          %334 = vnop
        $region32: #{tpu_custom_call.1} parent=27 // pred_fallthru
          _
        // Predicated region
        $region70: #{tpu_custom_call.1} parent=27 // pred_check
          %p335 = pneg %p75
        $region71: #{tpu_custom_call.1} parent=27 // pred_check_branch
          %337 = sbr.rel (%p335) target = $region73
        $region72: #{tpu_custom_call.1} parent=27 // pred_region
          %s338 = smul.u32 16, %s23
          %p339 = scmp.lt.s32.totalorder %s338, 31
          %s340 = scalar_select %p339, %s338, 31
          %s341 = smul.addr %s340, 4
          %s342 = scalar_lea.vmem %s1, %s341
          %s343 = smul.u32 16, %s23
        $region73: #{tpu_custom_call.1} parent=27 // pred_fallthru
          _
        // Predicated region
        $region74: #{tpu_custom_call.1} parent=27 // pred_check
          %p344 = pneg %p101
        $region75: #{tpu_custom_call.1} parent=27 // pred_check_branch
          %346 = sbr.rel (%p344) target = $region77
        $region76: #{tpu_custom_call.1} parent=27 // pred_region
          %s347 = smul.u32 16, %s22
          %p348 = scmp.lt.s32.totalorder %s347, 31
          %s349 = scalar_select %p348, %s347, 31
          %s350 = smul.addr %s349, 8
          %s351 = scalar_lea.vmem %s2, %s350
          %s352 = smul.u32 16, %s22
        $region77: #{tpu_custom_call.1} parent=27 // pred_fallthru
          _
      $region28: #{tpu_custom_call.1} parent=5 // pred_fallthru
        _
      %p353 = scmp.le.s32.totalorder 1, %s15
      %p354 = scmp.lt.s32.totalorder %s15, 5
      %p355 = pnand %p353, %p354
      %p356 = pneg %p355
      // Predicated region
      $region78: #{tpu_custom_call.1} parent=5 // pred_check
        _
      $region79: #{tpu_custom_call.1} parent=5 // pred_check_branch
        %358 = sbr.rel (%p355) target = $region81
      $region80: #{tpu_custom_call.1} parent=5 // pred_region
        %s359 = ssub.s32 %s15, 1
        %s360 = sand.u32 %s42, 1
        %s361 = sand.u32 %s42, 1
        %s362 = smul.addr %s361, 64
        %s363 = scalar_lea.vmem [#allocation4], %s362
        // Predicated region
        $region82: #{tpu_custom_call.1} parent=80 // pred_check
          %p364 = pneg %p55
        $region83: #{tpu_custom_call.1} parent=80 // pred_check_branch
          %366 = sbr.rel (%p364) target = $region85
        $region84: #{tpu_custom_call.1} parent=80 // pred_region
          _
        $region85: #{tpu_custom_call.1} parent=80 // pred_fallthru
          _
        %s367 = sand.u32 %s42, 1
        %s368 = sand.u32 %s42, 1
        %s369 = smul.addr %s368, 64
        %s370 = scalar_lea.vmem [#allocation4], %s369
        %p371 = pneg %p55
        %p372 = pneg %p52
        %s373 = smul.u32 16, %s25
        %p374 = scmp.lt.s32.totalorder %s373, 31
        %s375 = scalar_select %p374, %s373, 31
        %s376 = smul.addr %s375, 4
        %s377 = scalar_lea.vmem %s1, %s376
        %p378 = pneg %p81
        %p379 = pneg %p78
        %s380 = smul.u32 16, %s24
        %p381 = scmp.lt.s32.totalorder %s380, 31
        %s382 = scalar_select %p381, %s380, 31
        %s383 = smul.addr %s382, 8
        %s384 = scalar_lea.vmem %s2, %s383
        %p385 = pneg %p107
        %p386 = pneg %p104
        %p387 = pneg %p128
        %p388 = pneg %p125
        %p389 = pneg %p149
        %p390 = pneg %p146
        %p391 = pneg %p170
        %p392 = pneg %p167
        %p393 = pneg %p196
        %p394 = pneg %p193
        %s395 = sand.u32 %s183, 1
        %s396 = scalar_lea.sflag [#allocation6], %s395
        %s397 = sand.u32 %s183, 1
        %s398 = smul.addr %s397, 128
        %s399 = scalar_lea.vmem [#allocation5], %s398
        %s400 = smul.u32 16, %s24
        %s401 = smul.u32 16, %s25
        %p402 = scmp.lt.s32.totalorder %s401, 31
        %s403 = scalar_select %p402, %s401, 31
        %s404 = smul.addr %s403, 4
        %s405 = scalar_lea.vmem %s1, %s404
        %s406 = smul.u32 16, %s25
        %s407 = smul.u32 16, %s24
        %p408 = scmp.lt.s32.totalorder %s407, 31
        %s409 = scalar_select %p408, %s407, 31
        %s410 = smul.addr %s409, 8
        %s411 = scalar_lea.vmem %s2, %s410
        %s412 = smul.u32 16, %s24
        %s413 = smul.u32 16, %s24
        %p415 = scmp.eq.s32.totalorder %s25, 0
        // Predicated region
        $region86: #{tpu_custom_call.1} parent=80 // pred_check
          %p416 = pneg %p415
        $region87: #{tpu_custom_call.1} parent=80 // pred_check_branch
          %418 = sbr.rel (%p416) target = $region89
        $region88: #{tpu_custom_call.1} parent=80 // pred_region
          %vm419 = vcmask 130048
          %420 = vst.msk [vmem:[#allocation2] sm:$0xff] %vm419, 0.0
          %421 = vst.msk [vmem:[#allocation2 + $0x8] sm:$0xff] %vm419, 0.0
          %422 = vst.msk [vmem:[#allocation2 + $0x10] sm:$0xff] %vm419, 0.0
          %423 = vst.msk [vmem:[#allocation2 + $0x18] sm:$0xff] %vm419, 0.0
          %424 = vst.msk [vmem:[#allocation2 + $0x20] sm:$0xff] %vm419, 0.0
          %425 = vst.msk [vmem:[#allocation2 + $0x28] sm:$0xff] %vm419, 0.0
          %426 = vst.msk [vmem:[#allocation2 + $0x30] sm:$0xff] %vm419, 0.0
          %427 = vst.msk [vmem:[#allocation2 + $0x38] sm:$0xff] %vm419, 0.0
          %428 = vst.msk [vmem:[#allocation2 + $0x40] sm:$0xff] %vm419, 0.0
          %429 = vst.msk [vmem:[#allocation2 + $0x48] sm:$0xff] %vm419, 0.0
          %430 = vst.msk [vmem:[#allocation2 + $0x50] sm:$0xff] %vm419, 0.0
          %431 = vst.msk [vmem:[#allocation2 + $0x58] sm:$0xff] %vm419, 0.0
          %432 = vst.msk [vmem:[#allocation2 + $0x60] sm:$0xff] %vm419, 0.0
          %433 = vst.msk [vmem:[#allocation2 + $0x68] sm:$0xff] %vm419, 0.0
          %434 = vst.msk [vmem:[#allocation2 + $0x70] sm:$0xff] %vm419, 0.0
          %435 = vst.msk [vmem:[#allocation2 + $0x78] sm:$0xff] %vm419, 0.0
          %vm436 = vcmask 7168
          %437 = vst.msk [vmem:[#allocation3] sm:$0xff] %vm436, 0.0
          %438 = vst.msk [vmem:[#allocation3 + $0x8] sm:$0xff] %vm436, 0.0
          %439 = vst.msk [vmem:[#allocation3 + $0x10] sm:$0xff] %vm436, 0.0
          %440 = vst.msk [vmem:[#allocation3 + $0x18] sm:$0xff] %vm436, 0.0
          %441 = vst.msk [vmem:[#allocation3 + $0x20] sm:$0xff] %vm436, 0.0
          %442 = vst.msk [vmem:[#allocation3 + $0x28] sm:$0xff] %vm436, 0.0
          %443 = vst.msk [vmem:[#allocation3 + $0x30] sm:$0xff] %vm436, 0.0
          %444 = vst.msk [vmem:[#allocation3 + $0x38] sm:$0xff] %vm436, 0.0
          %445 = vst.msk [vmem:[#allocation3 + $0x40] sm:$0xff] %vm436, 0.0
          %446 = vst.msk [vmem:[#allocation3 + $0x48] sm:$0xff] %vm436, 0.0
          %447 = vst.msk [vmem:[#allocation3 + $0x50] sm:$0xff] %vm436, 0.0
          %448 = vst.msk [vmem:[#allocation3 + $0x58] sm:$0xff] %vm436, 0.0
          %449 = vst.msk [vmem:[#allocation3 + $0x60] sm:$0xff] %vm436, 0.0
          %450 = vst.msk [vmem:[#allocation3 + $0x68] sm:$0xff] %vm436, 0.0
          %451 = vst.msk [vmem:[#allocation3 + $0x70] sm:$0xff] %vm436, 0.0
          %452 = vst.msk [vmem:[#allocation3 + $0x78] sm:$0xff] %vm436, 0.0
        $region89: #{tpu_custom_call.1} parent=80 // pred_fallthru
          _
        %v453 = vld [vmem:[%s363] sm:$0xf]
        %v454 = vld [vmem:[%s363 + $0x4] sm:$0xf]
        %v455 = vld [vmem:[%s363 + $0x8] sm:$0xf]
        %v456 = vld [vmem:[%s363 + $0xc] sm:$0xf]
        %v457 = vld [vmem:[%s363 + $0x10] sm:$0xf]
        %v458 = vld [vmem:[%s363 + $0x14] sm:$0xf]
        %v459 = vld [vmem:[%s363 + $0x18] sm:$0xf]
        %v460 = vld [vmem:[%s363 + $0x1c] sm:$0xf]
        %v461 = vld [vmem:[%s363 + $0x20] sm:$0xf]
        %v462 = vld [vmem:[%s363 + $0x24] sm:$0xf]
        %v463 = vld [vmem:[%s363 + $0x28] sm:$0xf]
        %v464 = vld [vmem:[%s363 + $0x2c] sm:$0xf]
        %v465 = vld [vmem:[%s363 + $0x30] sm:$0xf]
        %v466 = vld [vmem:[%s363 + $0x34] sm:$0xf]
        %v467 = vld [vmem:[%s363 + $0x38] sm:$0xf]
        %v468 = vld [vmem:[%s363 + $0x3c] sm:$0xf]
        %v469 = vld [vmem:[#allocation2] sm:$0xff]
        %v470 = vld [vmem:[#allocation2 + $0x8] sm:$0xff]
        %v471 = vld [vmem:[#allocation2 + $0x10] sm:$0xff]
        %v472 = vld [vmem:[#allocation2 + $0x18] sm:$0xff]
        %v473 = vld [vmem:[#allocation2 + $0x20] sm:$0xff]
        %v474 = vld [vmem:[#allocation2 + $0x28] sm:$0xff]
        %v475 = vld [vmem:[#allocation2 + $0x30] sm:$0xff]
        %v476 = vld [vmem:[#allocation2 + $0x38] sm:$0xff]
        %v477 = vld [vmem:[#allocation2 + $0x40] sm:$0xff]
        %v478 = vld [vmem:[#allocation2 + $0x48] sm:$0xff]
        %v479 = vld [vmem:[#allocation2 + $0x50] sm:$0xff]
        %v480 = vld [vmem:[#allocation2 + $0x58] sm:$0xff]
        %v481 = vld [vmem:[#allocation2 + $0x60] sm:$0xff]
        %v482 = vld [vmem:[#allocation2 + $0x68] sm:$0xff]
        %v483 = vld [vmem:[#allocation2 + $0x70] sm:$0xff]
        %v484 = vld [vmem:[#allocation2 + $0x78] sm:$0xff]
        %v485 = vld [vmem:[%s405] sm:$0xf]
        %v486 = vld [vmem:[%s405 + $0x4] sm:$0xf]
        %v487 = vld [vmem:[%s405 + $0x8] sm:$0xf]
        %v488 = vld [vmem:[%s405 + $0xc] sm:$0xf]
        %v489 = vld [vmem:[%s405 + $0x10] sm:$0xf]
        %v490 = vld [vmem:[%s405 + $0x14] sm:$0xf]
        %v491 = vld [vmem:[%s405 + $0x18] sm:$0xf]
        %v492 = vld [vmem:[%s405 + $0x1c] sm:$0xf]
        %v493 = vld [vmem:[%s405 + $0x20] sm:$0xf]
        %v494 = vld [vmem:[%s405 + $0x24] sm:$0xf]
        %v495 = vld [vmem:[%s405 + $0x28] sm:$0xf]
        %v496 = vld [vmem:[%s405 + $0x2c] sm:$0xf]
        %v497 = vld [vmem:[%s405 + $0x30] sm:$0xf]
        %v498 = vld [vmem:[%s405 + $0x34] sm:$0xf]
        %v499 = vld [vmem:[%s405 + $0x38] sm:$0xf]
        %v500 = vld [vmem:[%s405 + $0x3c] sm:$0xf]
        %v517 = vunpack.c.l.b16 %v453
        %v518 = vunpack.c.l.b16 %v454
        %v519 = vunpack.c.l.b16 %v455
        %v520 = vunpack.c.l.b16 %v456
        %v521 = vunpack.c.l.b16 %v457
        %v522 = vunpack.c.l.b16 %v458
        %v523 = vunpack.c.l.b16 %v459
        %v524 = vunpack.c.l.b16 %v460
        %v525 = vunpack.c.l.b16 %v461
        %v526 = vunpack.c.l.b16 %v462
        %v527 = vunpack.c.l.b16 %v463
        %v528 = vunpack.c.l.b16 %v464
        %v529 = vunpack.c.l.b16 %v465
        %v530 = vunpack.c.l.b16 %v466
        %v531 = vunpack.c.l.b16 %v467
        %v532 = vunpack.c.l.b16 %v468
        %v533 = vpack.c.b16 %v518, %v517
        %v534 = vpack.c.b16 %v520, %v519
        %v535 = vpack.c.b16 %v522, %v521
        %v536 = vpack.c.b16 %v524, %v523
        %v537 = vpack.c.b16 %v526, %v525
        %v538 = vpack.c.b16 %v528, %v527
        %v539 = vpack.c.b16 %v530, %v529
        %v540 = vpack.c.b16 %v532, %v531
        %v565 = vunpack.c.l.b16 %v485
        %v566 = vunpack.c.l.b16 %v486
        %v567 = vunpack.c.l.b16 %v487
        %v568 = vunpack.c.l.b16 %v488
        %v569 = vunpack.c.l.b16 %v489
        %v570 = vunpack.c.l.b16 %v490
        %v571 = vunpack.c.l.b16 %v491
        %v572 = vunpack.c.l.b16 %v492
        %v573 = vunpack.c.l.b16 %v493
        %v574 = vunpack.c.l.b16 %v494
        %v575 = vunpack.c.l.b16 %v495
        %v576 = vunpack.c.l.b16 %v496
        %v577 = vunpack.c.l.b16 %v497
        %v578 = vunpack.c.l.b16 %v498
        %v579 = vunpack.c.l.b16 %v499
        %v580 = vunpack.c.l.b16 %v500
        %v581 = vpack.c.b16 %v566, %v565
        %v582 = vpack.c.b16 %v568, %v567
        %v583 = vpack.c.b16 %v570, %v569
        %v584 = vpack.c.b16 %v572, %v571
        %v585 = vpack.c.b16 %v574, %v573
        %v586 = vpack.c.b16 %v576, %v575
        %v587 = vpack.c.b16 %v578, %v577
        %v588 = vpack.c.b16 %v580, %v579
        %597 = vmatprep.subr.bf16.mxu0 0
        %598 = vmatpush1.bf16.msra.mxu0 %v581
        %599 = vmatprep.subr.bf16.mxu0 0
        %600 = vmatpush1.bf16.msra.mxu0 %v582
        %601 = vmatprep.subr.bf16.mxu0 0
        %602 = vmatpush1.bf16.msra.mxu0 %v583
        %603 = vmatprep.subr.bf16.mxu0 0
        %604 = vmatpush1.bf16.msra.mxu0 %v584
        %605 = vmatprep.subr.bf16.mxu0 0
        %606 = vmatpush1.bf16.msra.mxu0 %v585
        %607 = vmatprep.subr.bf16.mxu0 0
        %608 = vmatpush1.bf16.msra.mxu0 %v586
        %609 = vmatprep.subr.bf16.mxu0 0
        %610 = vmatpush1.bf16.msra.mxu0 %v587
        %611 = vmatprep.subr.bf16.mxu0 0
        %612 = vmatpush1.bf16.msra.mxu0 %v588
        %613 = vmatprep.subr.bf16.mxu0 0
        %614 = vmatpush1.bf16.msra.mxu0 0
        %615 = vmatprep.subr.bf16.mxu0 0
        %616 = vmatpush1.bf16.msra.mxu0 0
        %617 = vmatprep.subr.bf16.mxu0 0
        %618 = vmatpush1.bf16.msra.mxu0 0
        %619 = vmatprep.subr.bf16.mxu0 0
        %620 = vmatpush1.bf16.msra.mxu0 0
        %621 = vmatprep.subr.bf16.mxu0 0
        %622 = vmatpush1.bf16.msra.mxu0 0
        %623 = vmatprep.subr.bf16.mxu0 0
        %624 = vmatpush1.bf16.msra.mxu0 0
        %625 = vmatprep.subr.bf16.mxu0 0
        %626 = vmatpush1.bf16.msra.mxu0 0
        %627 = vmatprep.subr.bf16.mxu0 0
        %628 = vmatpush1.bf16.msra.mxu0 0
        %629 = vmatprep.mubr.bf16.mxu0 0
        %630 = vmatmul.mubr.bf16.gmra.mrb[0].mxu0 %v533
        %v631 = vpop.f32.mrb[0].mxu0
        %v632 = vadd.f32 0.0, %v631
        %v633 = vpop.f32.mrb[0].mxu0
        %v634 = vpop.f32.mrb[0].mxu0
        %v635 = vadd.f32 0.0, %v634
        %v636 = vpop.f32.mrb[0].mxu0
        %637 = vmatprep.mubr.bf16.mxu0 0
        %638 = vmatmul.mubr.bf16.gmra.mrb[0].mxu0 %v534
        %v639 = vpop.f32.mrb[0].mxu0
        %v640 = vadd.f32 0.0, %v639
        %v641 = vpop.f32.mrb[0].mxu0
        %v642 = vpop.f32.mrb[0].mxu0
        %v643 = vadd.f32 0.0, %v642
        %v644 = vpop.f32.mrb[0].mxu0
        %645 = vmatprep.mubr.bf16.mxu0 0
        %646 = vmatmul.mubr.bf16.gmra.mrb[0].mxu0 %v535
        %v647 = vpop.f32.mrb[0].mxu0
        %v648 = vadd.f32 0.0, %v647
        %v649 = vpop.f32.mrb[0].mxu0
        %v650 = vpop.f32.mrb[0].mxu0
        %v651 = vadd.f32 0.0, %v650
        %v652 = vpop.f32.mrb[0].mxu0
        %653 = vmatprep.mubr.bf16.mxu0 0
        %654 = vmatmul.mubr.bf16.gmra.mrb[0].mxu0 %v536
        %v655 = vpop.f32.mrb[0].mxu0
        %v656 = vadd.f32 0.0, %v655
        %v657 = vpop.f32.mrb[0].mxu0
        %v658 = vpop.f32.mrb[0].mxu0
        %v659 = vadd.f32 0.0, %v658
        %v660 = vpop.f32.mrb[0].mxu0
        %661 = vmatprep.mubr.bf16.mxu0 0
        %662 = vmatmul.mubr.bf16.gmra.mrb[0].mxu0 %v537
        %v663 = vpop.f32.mrb[0].mxu0
        %v664 = vadd.f32 0.0, %v663
        %v665 = vpop.f32.mrb[0].mxu0
        %v666 = vpop.f32.mrb[0].mxu0
        %v667 = vadd.f32 0.0, %v666
        %v668 = vpop.f32.mrb[0].mxu0
        %669 = vmatprep.mubr.bf16.mxu0 0
        %670 = vmatmul.mubr.bf16.gmra.mrb[0].mxu0 %v538
        %v671 = vpop.f32.mrb[0].mxu0
        %v672 = vadd.f32 0.0, %v671
        %v673 = vpop.f32.mrb[0].mxu0
        %v674 = vpop.f32.mrb[0].mxu0
        %v675 = vadd.f32 0.0, %v674
        %v676 = vpop.f32.mrb[0].mxu0
        %677 = vmatprep.mubr.bf16.mxu0 0
        %678 = vmatmul.mubr.bf16.gmra.mrb[0].mxu0 %v539
        %v679 = vpop.f32.mrb[0].mxu0
        %v680 = vadd.f32 0.0, %v679
        %v681 = vpop.f32.mrb[0].mxu0
        %v682 = vpop.f32.mrb[0].mxu0
        %v683 = vadd.f32 0.0, %v682
        %v684 = vpop.f32.mrb[0].mxu0
        %685 = vmatprep.mubr.bf16.mxu0 0
        %686 = vmatmul.mubr.bf16.gmra.mrb[0].mxu0 %v540
        %v687 = vpop.f32.mrb[0].mxu0
        %v688 = vadd.f32 0.0, %v687
        %v689 = vpop.f32.mrb[0].mxu0
        %v690 = vpop.f32.mrb[0].mxu0
        %v691 = vadd.f32 0.0, %v690
        %v692 = vpop.f32.mrb[0].mxu0
        %693 = vdwg.mxu0
        %v694 = vadd.f32 %v469, %v632
        %v695 = vadd.f32 %v470, %v635
        %v696 = vadd.f32 %v471, %v640
        %v697 = vadd.f32 %v472, %v643
        %v698 = vadd.f32 %v473, %v648
        %v699 = vadd.f32 %v474, %v651
        %v700 = vadd.f32 %v475, %v656
        %v701 = vadd.f32 %v476, %v659
        %v702 = vadd.f32 %v477, %v664
        %v703 = vadd.f32 %v478, %v667
        %v704 = vadd.f32 %v479, %v672
        %v705 = vadd.f32 %v480, %v675
        %v706 = vadd.f32 %v481, %v680
        %v707 = vadd.f32 %v482, %v683
        %v708 = vadd.f32 %v483, %v688
        %v709 = vadd.f32 %v484, %v691
        %vm710 = vcmask 130048
        %711 = vst.msk [vmem:[#allocation2] sm:$0xff] %vm710, %v694
        %712 = vst.msk [vmem:[#allocation2 + $0x8] sm:$0xff] %vm710, %v695
        %713 = vst.msk [vmem:[#allocation2 + $0x10] sm:$0xff] %vm710, %v696
        %714 = vst.msk [vmem:[#allocation2 + $0x18] sm:$0xff] %vm710, %v697
        %715 = vst.msk [vmem:[#allocation2 + $0x20] sm:$0xff] %vm710, %v698
        %716 = vst.msk [vmem:[#allocation2 + $0x28] sm:$0xff] %vm710, %v699
        %717 = vst.msk [vmem:[#allocation2 + $0x30] sm:$0xff] %vm710, %v700
        %718 = vst.msk [vmem:[#allocation2 + $0x38] sm:$0xff] %vm710, %v701
        %719 = vst.msk [vmem:[#allocation2 + $0x40] sm:$0xff] %vm710, %v702
        %720 = vst.msk [vmem:[#allocation2 + $0x48] sm:$0xff] %vm710, %v703
        %721 = vst.msk [vmem:[#allocation2 + $0x50] sm:$0xff] %vm710, %v704
        %722 = vst.msk [vmem:[#allocation2 + $0x58] sm:$0xff] %vm710, %v705
        %723 = vst.msk [vmem:[#allocation2 + $0x60] sm:$0xff] %vm710, %v706
        %724 = vst.msk [vmem:[#allocation2 + $0x68] sm:$0xff] %vm710, %v707
        %725 = vst.msk [vmem:[#allocation2 + $0x70] sm:$0xff] %vm710, %v708
        %726 = vst.msk [vmem:[#allocation2 + $0x78] sm:$0xff] %vm710, %v709
        %v727 = vld [vmem:[#allocation3] sm:$0xff]
        %v728 = vld [vmem:[#allocation3 + $0x8] sm:$0xff]
        %v729 = vld [vmem:[#allocation3 + $0x10] sm:$0xff]
        %v730 = vld [vmem:[#allocation3 + $0x18] sm:$0xff]
        %v731 = vld [vmem:[#allocation3 + $0x20] sm:$0xff]
        %v732 = vld [vmem:[#allocation3 + $0x28] sm:$0xff]
        %v733 = vld [vmem:[#allocation3 + $0x30] sm:$0xff]
        %v734 = vld [vmem:[#allocation3 + $0x38] sm:$0xff]
        %v735 = vld [vmem:[#allocation3 + $0x40] sm:$0xff]
        %v736 = vld [vmem:[#allocation3 + $0x48] sm:$0xff]
        %v737 = vld [vmem:[#allocation3 + $0x50] sm:$0xff]
        %v738 = vld [vmem:[#allocation3 + $0x58] sm:$0xff]
        %v739 = vld [vmem:[#allocation3 + $0x60] sm:$0xff]
        %v740 = vld [vmem:[#allocation3 + $0x68] sm:$0xff]
        %v741 = vld [vmem:[#allocation3 + $0x70] sm:$0xff]
        %v742 = vld [vmem:[#allocation3 + $0x78] sm:$0xff]
        %v743 = vunpack.c.l.bf16 %v453
        %v744 = vunpack.c.l.bf16 %v454
        %v745 = vunpack.c.l.bf16 %v455
        %v746 = vunpack.c.l.bf16 %v456
        %v747 = vunpack.c.l.bf16 %v457
        %v748 = vunpack.c.l.bf16 %v458
        %v749 = vunpack.c.l.bf16 %v459
        %v750 = vunpack.c.l.bf16 %v460
        %v751 = vunpack.c.l.bf16 %v461
        %v752 = vunpack.c.l.bf16 %v462
        %v753 = vunpack.c.l.bf16 %v463
        %v754 = vunpack.c.l.bf16 %v464
        %v755 = vunpack.c.l.bf16 %v465
        %v756 = vunpack.c.l.bf16 %v466
        %v757 = vunpack.c.l.bf16 %v467
        %v758 = vunpack.c.l.bf16 %v468
        %759 = vadd.xlane.f32.xlu0 %v743
        %v760 = vpop.xlane.xlu0 %759
        %761 = vadd.xlane.f32.xlu0 %v744
        %v762 = vpop.xlane.xlu0 %761
        %763 = vadd.xlane.f32.xlu0 %v745
        %v764 = vpop.xlane.xlu0 %763
        %765 = vadd.xlane.f32.xlu0 %v746
        %v766 = vpop.xlane.xlu0 %765
        %767 = vadd.xlane.f32.xlu0 %v747
        %v768 = vpop.xlane.xlu0 %767
        %769 = vadd.xlane.f32.xlu0 %v748
        %v770 = vpop.xlane.xlu0 %769
        %771 = vadd.xlane.f32.xlu0 %v749
        %v772 = vpop.xlane.xlu0 %771
        %773 = vadd.xlane.f32.xlu0 %v750
        %v774 = vpop.xlane.xlu0 %773
        %775 = vadd.xlane.f32.xlu0 %v751
        %v776 = vpop.xlane.xlu0 %775
        %777 = vadd.xlane.f32.xlu0 %v752
        %v778 = vpop.xlane.xlu0 %777
        %779 = vadd.xlane.f32.xlu0 %v753
        %v780 = vpop.xlane.xlu0 %779
        %781 = vadd.xlane.f32.xlu0 %v754
        %v782 = vpop.xlane.xlu0 %781
        %783 = vadd.xlane.f32.xlu0 %v755
        %v784 = vpop.xlane.xlu0 %783
        %785 = vadd.xlane.f32.xlu0 %v756
        %v786 = vpop.xlane.xlu0 %785
        %787 = vadd.xlane.f32.xlu0 %v757
        %v788 = vpop.xlane.xlu0 %787
        %789 = vadd.xlane.f32.xlu0 %v758
        %v790 = vpop.xlane.xlu0 %789
        %v791 = vadd.f32 %v727, %v760
        %v792 = vadd.f32 %v728, %v762
        %v793 = vadd.f32 %v729, %v764
        %v794 = vadd.f32 %v730, %v766
        %v795 = vadd.f32 %v731, %v768
        %v796 = vadd.f32 %v732, %v770
        %v797 = vadd.f32 %v733, %v772
        %v798 = vadd.f32 %v734, %v774
        %v799 = vadd.f32 %v735, %v776
        %v800 = vadd.f32 %v736, %v778
        %v801 = vadd.f32 %v737, %v780
        %v802 = vadd.f32 %v738, %v782
        %v803 = vadd.f32 %v739, %v784
        %v804 = vadd.f32 %v740, %v786
        %v805 = vadd.f32 %v741, %v788
        %v806 = vadd.f32 %v742, %v790
        %vm807 = vcmask 7168
        %808 = vst.msk [vmem:[#allocation3] sm:$0xff] %vm807, %v791
        %809 = vst.msk [vmem:[#allocation3 + $0x8] sm:$0xff] %vm807, %v792
        %810 = vst.msk [vmem:[#allocation3 + $0x10] sm:$0xff] %vm807, %v793
        %811 = vst.msk [vmem:[#allocation3 + $0x18] sm:$0xff] %vm807, %v794
        %812 = vst.msk [vmem:[#allocation3 + $0x20] sm:$0xff] %vm807, %v795
        %813 = vst.msk [vmem:[#allocation3 + $0x28] sm:$0xff] %vm807, %v796
        %814 = vst.msk [vmem:[#allocation3 + $0x30] sm:$0xff] %vm807, %v797
        %815 = vst.msk [vmem:[#allocation3 + $0x38] sm:$0xff] %vm807, %v798
        %816 = vst.msk [vmem:[#allocation3 + $0x40] sm:$0xff] %vm807, %v799
        %817 = vst.msk [vmem:[#allocation3 + $0x48] sm:$0xff] %vm807, %v800
        %818 = vst.msk [vmem:[#allocation3 + $0x50] sm:$0xff] %vm807, %v801
        %819 = vst.msk [vmem:[#allocation3 + $0x58] sm:$0xff] %vm807, %v802
        %820 = vst.msk [vmem:[#allocation3 + $0x60] sm:$0xff] %vm807, %v803
        %821 = vst.msk [vmem:[#allocation3 + $0x68] sm:$0xff] %vm807, %v804
        %822 = vst.msk [vmem:[#allocation3 + $0x70] sm:$0xff] %vm807, %v805
        %823 = vst.msk [vmem:[#allocation3 + $0x78] sm:$0xff] %vm807, %v806
        %p824 = scmp.eq.s32.totalorder %s25, 1
        // Predicated region
        $region90: #{tpu_custom_call.1} parent=80 // pred_check
          %p825 = pneg %p824
        $region91: #{tpu_custom_call.1} parent=80 // pred_check_branch
          %827 = sbr.rel (%p825) target = $region93
        $region92: #{tpu_custom_call.1} parent=80 // pred_region
          %v828 = vld [vmem:[#allocation3] sm:$0xff]
          %v829 = vld [vmem:[#allocation3 + $0x8] sm:$0xff]
          %v830 = vld [vmem:[#allocation3 + $0x10] sm:$0xff]
          %v831 = vld [vmem:[#allocation3 + $0x18] sm:$0xff]
          %v832 = vld [vmem:[#allocation3 + $0x20] sm:$0xff]
          %v833 = vld [vmem:[#allocation3 + $0x28] sm:$0xff]
          %v834 = vld [vmem:[#allocation3 + $0x30] sm:$0xff]
          %v835 = vld [vmem:[#allocation3 + $0x38] sm:$0xff]
          %v836 = vld [vmem:[#allocation3 + $0x40] sm:$0xff]
          %v837 = vld [vmem:[#allocation3 + $0x48] sm:$0xff]
          %v838 = vld [vmem:[#allocation3 + $0x50] sm:$0xff]
          %v839 = vld [vmem:[#allocation3 + $0x58] sm:$0xff]
          %v840 = vld [vmem:[#allocation3 + $0x60] sm:$0xff]
          %v841 = vld [vmem:[#allocation3 + $0x68] sm:$0xff]
          %v842 = vld [vmem:[#allocation3 + $0x70] sm:$0xff]
          %v843 = vld [vmem:[#allocation3 + $0x78] sm:$0xff]
          %v844 = vmax.f32 %v828, 1.0
          %v845 = vmax.f32 %v829, 1.0
          %v846 = vmax.f32 %v830, 1.0
          %v847 = vmax.f32 %v831, 1.0
          %v848 = vmax.f32 %v832, 1.0
          %v849 = vmax.f32 %v833, 1.0
          %v850 = vmax.f32 %v834, 1.0
          %v851 = vmax.f32 %v835, 1.0
          %v852 = vmax.f32 %v836, 1.0
          %v853 = vmax.f32 %v837, 1.0
          %v854 = vmax.f32 %v838, 1.0
          %v855 = vmax.f32 %v839, 1.0
          %v856 = vmax.f32 %v840, 1.0
          %v857 = vmax.f32 %v841, 1.0
          %v858 = vmax.f32 %v842, 1.0
          %v859 = vmax.f32 %v843, 1.0
          %v860 = vrcp.pop %v844
          %v861 = vrcp.pop %v845
          %v862 = vrcp.pop %v846
          %v863 = vrcp.pop %v847
          %v864 = vrcp.pop %v848
          %v865 = vrcp.pop %v849
          %v866 = vrcp.pop %v850
          %v867 = vrcp.pop %v851
          %v868 = vrcp.pop %v852
          %v869 = vrcp.pop %v853
          %v870 = vrcp.pop %v854
          %v871 = vrcp.pop %v855
          %v872 = vrcp.pop %v856
          %v873 = vrcp.pop %v857
          %v874 = vrcp.pop %v858
          %v875 = vrcp.pop %v859
          %v876 = vld [vmem:[#allocation2] sm:$0xff]
          %v877 = vld [vmem:[#allocation2 + $0x8] sm:$0xff]
          %v878 = vld [vmem:[#allocation2 + $0x10] sm:$0xff]
          %v879 = vld [vmem:[#allocation2 + $0x18] sm:$0xff]
          %v880 = vld [vmem:[#allocation2 + $0x20] sm:$0xff]
          %v881 = vld [vmem:[#allocation2 + $0x28] sm:$0xff]
          %v882 = vld [vmem:[#allocation2 + $0x30] sm:$0xff]
          %v883 = vld [vmem:[#allocation2 + $0x38] sm:$0xff]
          %v884 = vld [vmem:[#allocation2 + $0x40] sm:$0xff]
          %v885 = vld [vmem:[#allocation2 + $0x48] sm:$0xff]
          %v886 = vld [vmem:[#allocation2 + $0x50] sm:$0xff]
          %v887 = vld [vmem:[#allocation2 + $0x58] sm:$0xff]
          %v888 = vld [vmem:[#allocation2 + $0x60] sm:$0xff]
          %v889 = vld [vmem:[#allocation2 + $0x68] sm:$0xff]
          %v890 = vld [vmem:[#allocation2 + $0x70] sm:$0xff]
          %v891 = vld [vmem:[#allocation2 + $0x78] sm:$0xff]
          %893 = vset.pattern.permute.xlu0 0
          %894 = vperm.xlu0 %893, %v860
          %v895 = vpop.permute.xlu0 %894
          %898 = vset.pattern.permute.xlu0 0
          %899 = vperm.xlu0 %898, %v861
          %v900 = vpop.permute.xlu0 %899
          %903 = vset.pattern.permute.xlu0 0
          %904 = vperm.xlu0 %903, %v862
          %v905 = vpop.permute.xlu0 %904
          %908 = vset.pattern.permute.xlu0 0
          %909 = vperm.xlu0 %908, %v863
          %v910 = vpop.permute.xlu0 %909
          %913 = vset.pattern.permute.xlu0 0
          %914 = vperm.xlu0 %913, %v864
          %v915 = vpop.permute.xlu0 %914
          %918 = vset.pattern.permute.xlu0 0
          %919 = vperm.xlu0 %918, %v865
          %v920 = vpop.permute.xlu0 %919
          %923 = vset.pattern.permute.xlu0 0
          %924 = vperm.xlu0 %923, %v866
          %v925 = vpop.permute.xlu0 %924
          %928 = vset.pattern.permute.xlu0 0
          %929 = vperm.xlu0 %928, %v867
          %v930 = vpop.permute.xlu0 %929
          %933 = vset.pattern.permute.xlu0 0
          %934 = vperm.xlu0 %933, %v868
          %v935 = vpop.permute.xlu0 %934
          %938 = vset.pattern.permute.xlu0 0
          %939 = vperm.xlu0 %938, %v869
          %v940 = vpop.permute.xlu0 %939
          %943 = vset.pattern.permute.xlu0 0
          %944 = vperm.xlu0 %943, %v870
          %v945 = vpop.permute.xlu0 %944
          %948 = vset.pattern.permute.xlu0 0
          %949 = vperm.xlu0 %948, %v871
          %v950 = vpop.permute.xlu0 %949
          %953 = vset.pattern.permute.xlu0 0
          %954 = vperm.xlu0 %953, %v872
          %v955 = vpop.permute.xlu0 %954
          %958 = vset.pattern.permute.xlu0 0
          %959 = vperm.xlu0 %958, %v873
          %v960 = vpop.permute.xlu0 %959
          %963 = vset.pattern.permute.xlu0 0
          %964 = vperm.xlu0 %963, %v874
          %v965 = vpop.permute.xlu0 %964
          %968 = vset.pattern.permute.xlu0 0
          %969 = vperm.xlu0 %968, %v875
          %v970 = vpop.permute.xlu0 %969
          %v972 = vmul.f32 %v876, %v895
          %v973 = vmul.f32 %v877, %v900
          %v974 = vmul.f32 %v878, %v905
          %v975 = vmul.f32 %v879, %v910
          %v976 = vmul.f32 %v880, %v915
          %v977 = vmul.f32 %v881, %v920
          %v978 = vmul.f32 %v882, %v925
          %v979 = vmul.f32 %v883, %v930
          %v980 = vmul.f32 %v884, %v935
          %v981 = vmul.f32 %v885, %v940
          %v982 = vmul.f32 %v886, %v945
          %v983 = vmul.f32 %v887, %v950
          %v984 = vmul.f32 %v888, %v955
          %v985 = vmul.f32 %v889, %v960
          %v986 = vmul.f32 %v890, %v965
          %v987 = vmul.f32 %v891, %v970
          %v988 = vld [vmem:[%s411] sm:$0xff]
          %v989 = vld [vmem:[%s411 + $0x8] sm:$0xff]
          %v990 = vld [vmem:[%s411 + $0x10] sm:$0xff]
          %v991 = vld [vmem:[%s411 + $0x18] sm:$0xff]
          %v992 = vld [vmem:[%s411 + $0x20] sm:$0xff]
          %v993 = vld [vmem:[%s411 + $0x28] sm:$0xff]
          %v994 = vld [vmem:[%s411 + $0x30] sm:$0xff]
          %v995 = vld [vmem:[%s411 + $0x38] sm:$0xff]
          %v996 = vld [vmem:[%s411 + $0x40] sm:$0xff]
          %v997 = vld [vmem:[%s411 + $0x48] sm:$0xff]
          %v998 = vld [vmem:[%s411 + $0x50] sm:$0xff]
          %v999 = vld [vmem:[%s411 + $0x58] sm:$0xff]
          %v1000 = vld [vmem:[%s411 + $0x60] sm:$0xff]
          %v1001 = vld [vmem:[%s411 + $0x68] sm:$0xff]
          %v1002 = vld [vmem:[%s411 + $0x70] sm:$0xff]
          %v1003 = vld [vmem:[%s411 + $0x78] sm:$0xff]
          %v1004 = vld [vmem:[%s3] sm:$0xff]
          %v1005 = vld [vmem:[%s3 + $0x8] sm:$0xff]
          %v1006 = vld [vmem:[%s4] sm:$0xff]
          %v1007 = vld [vmem:[%s4 + $0x8] sm:$0xff]
          %v1009 = vsel %vm710, %v972, 0
          %v1012 = vsel %vm710, %v973, 0
          %v1015 = vsel %vm710, %v974, 0
          %v1018 = vsel %vm710, %v975, 0
          %v1021 = vsel %vm710, %v976, 0
          %v1024 = vsel %vm710, %v977, 0
          %v1027 = vsel %vm710, %v978, 0
          %v1030 = vsel %vm710, %v979, 0
          %v1033 = vsel %vm710, %v980, 0
          %v1036 = vsel %vm710, %v981, 0
          %v1039 = vsel %vm710, %v982, 0
          %v1042 = vsel %vm710, %v983, 0
          %v1045 = vsel %vm710, %v984, 0
          %v1048 = vsel %vm710, %v985, 0
          %v1051 = vsel %vm710, %v986, 0
          %v1054 = vsel %vm710, %v987, 0
          %1056 = vmatprep.subr.mxu0 0.0
          %1057 = vmatpush1.msra.mxu0 %v1006
          %1058 = vmatprep.subr.mxu0 0.0
          %1059 = vmatpush1.msra.mxu0 %v1007
          %1060 = vmatprep.subr.mxu0 0.0
          %1061 = vmatpush1.msra.mxu0 0.0
          %1062 = vmatprep.subr.mxu0 0.0
          %1063 = vmatpush1.msra.mxu0 0.0
          %1064 = vmatprep.subr.mxu0 0.0
          %1065 = vmatpush1.msra.mxu0 0.0
          %1066 = vmatprep.subr.mxu0 0.0
          %1067 = vmatpush1.msra.mxu0 0.0
          %1068 = vmatprep.subr.mxu0 0.0
          %1069 = vmatpush1.msra.mxu0 0.0
          %1070 = vmatprep.subr.mxu0 0.0
          %1071 = vmatpush1.msra.mxu0 0.0
          %1072 = vmatprep.subr.mxu0 0.0
          %1073 = vmatpush1.msra.mxu0 0.0
          %1074 = vmatprep.subr.mxu0 0.0
          %1075 = vmatpush1.msra.mxu0 0.0
          %1076 = vmatprep.subr.mxu0 0.0
          %1077 = vmatpush1.msra.mxu0 0.0
          %1078 = vmatprep.subr.mxu0 0.0
          %1079 = vmatpush1.msra.mxu0 0.0
          %1080 = vmatprep.subr.mxu0 0.0
          %1081 = vmatpush1.msra.mxu0 0.0
          %1082 = vmatprep.subr.mxu0 0.0
          %1083 = vmatpush1.msra.mxu0 0.0
          %1084 = vmatprep.subr.mxu0 0.0
          %1085 = vmatpush1.msra.mxu0 0.0
          %1086 = vmatprep.subr.mxu0 0.0
          %1087 = vmatpush1.msra.mxu0 0.0
          %1088 = vmatprep.subr.mxu0 0.0
          %1089 = vmatpush1.msra.mxu0 0.0
          %1090 = vmatprep.subr.mxu0 0.0
          %1091 = vmatpush1.msra.mxu0 0.0
          %1092 = vmatprep.subr.mxu0 0.0
          %1093 = vmatpush1.msra.mxu0 0.0
          %1094 = vmatprep.subr.mxu0 0.0
          %1095 = vmatpush1.msra.mxu0 0.0
          %1096 = vmatprep.subr.mxu0 0.0
          %1097 = vmatpush1.msra.mxu0 0.0
          %1098 = vmatprep.subr.mxu0 0.0
          %1099 = vmatpush1.msra.mxu0 0.0
          %1100 = vmatprep.subr.mxu0 0.0
          %1101 = vmatpush1.msra.mxu0 0.0
          %1102 = vmatprep.subr.mxu0 0.0
          %1103 = vmatpush1.msra.mxu0 0.0
          %1104 = vmatprep.subr.mxu0 0.0
          %1105 = vmatpush1.msra.mxu0 0.0
          %1106 = vmatprep.subr.mxu0 0.0
          %1107 = vmatpush1.msra.mxu0 0.0
          %1108 = vmatprep.subr.mxu0 0.0
          %1109 = vmatpush1.msra.mxu0 0.0
          %1110 = vmatprep.subr.mxu0 0.0
          %1111 = vmatpush1.msra.mxu0 0.0
          %1112 = vmatprep.subr.mxu0 0.0
          %1113 = vmatpush1.msra.mxu0 0.0
          %1114 = vmatprep.subr.mxu0 0.0
          %1115 = vmatpush1.msra.mxu0 0.0
          %1116 = vmatprep.subr.mxu0 0.0
          %1117 = vmatpush1.msra.mxu0 0.0
          %1118 = vmatprep.subr.mxu0 0.0
          %1119 = vmatpush1.msra.mxu0 0.0
          %1120 = vmatprep.mubr.f32.mxu0 0.0
          %1121 = vmatmul.mubr.f32.gmra.mrb[0].mxu0 %v1009
          %v1122 = vpop.f32.mrb[0].mxu0
          %v1123 = vadd.f32 0.0, %v1122
          %v1124 = vpop.f32.mrb[0].mxu0
          %1125 = vmatprep.mubr.f32.mxu0 0.0
          %1126 = vmatmul.mubr.f32.gmra.mrb[0].mxu0 %v1012
          %v1127 = vpop.f32.mrb[0].mxu0
          %v1128 = vadd.f32 0.0, %v1127
          %v1129 = vpop.f32.mrb[0].mxu0
          %1130 = vmatprep.mubr.f32.mxu0 0.0
          %1131 = vmatmul.mubr.f32.gmra.mrb[0].mxu0 %v1015
          %v1132 = vpop.f32.mrb[0].mxu0
          %v1133 = vadd.f32 0.0, %v1132
          %v1134 = vpop.f32.mrb[0].mxu0
          %1135 = vmatprep.mubr.f32.mxu0 0.0
          %1136 = vmatmul.mubr.f32.gmra.mrb[0].mxu0 %v1018
          %v1137 = vpop.f32.mrb[0].mxu0
          %v1138 = vadd.f32 0.0, %v1137
          %v1139 = vpop.f32.mrb[0].mxu0
          %1140 = vmatprep.mubr.f32.mxu0 0.0
          %1141 = vmatmul.mubr.f32.gmra.mrb[0].mxu0 %v1021
          %v1142 = vpop.f32.mrb[0].mxu0
          %v1143 = vadd.f32 0.0, %v1142
          %v1144 = vpop.f32.mrb[0].mxu0
          %1145 = vmatprep.mubr.f32.mxu0 0.0
          %1146 = vmatmul.mubr.f32.gmra.mrb[0].mxu0 %v1024
          %v1147 = vpop.f32.mrb[0].mxu0
          %v1148 = vadd.f32 0.0, %v1147
          %v1149 = vpop.f32.mrb[0].mxu0
          %1150 = vmatprep.mubr.f32.mxu0 0.0
          %1151 = vmatmul.mubr.f32.gmra.mrb[0].mxu0 %v1027
          %v1152 = vpop.f32.mrb[0].mxu0
          %v1153 = vadd.f32 0.0, %v1152
          %v1154 = vpop.f32.mrb[0].mxu0
          %1155 = vmatprep.mubr.f32.mxu0 0.0
          %1156 = vmatmul.mubr.f32.gmra.mrb[0].mxu0 %v1030
          %v1157 = vpop.f32.mrb[0].mxu0
          %v1158 = vadd.f32 0.0, %v1157
          %v1159 = vpop.f32.mrb[0].mxu0
          %1160 = vmatprep.mubr.f32.mxu0 0.0
          %1161 = vmatmul.mubr.f32.gmra.mrb[0].mxu0 %v1033
          %v1162 = vpop.f32.mrb[0].mxu0
          %v1163 = vadd.f32 0.0, %v1162
          %v1164 = vpop.f32.mrb[0].mxu0
          %1165 = vmatprep.mubr.f32.mxu0 0.0
          %1166 = vmatmul.mubr.f32.gmra.mrb[0].mxu0 %v1036
          %v1167 = vpop.f32.mrb[0].mxu0
          %v1168 = vadd.f32 0.0, %v1167
          %v1169 = vpop.f32.mrb[0].mxu0
          %1170 = vmatprep.mubr.f32.mxu0 0.0
          %1171 = vmatmul.mubr.f32.gmra.mrb[0].mxu0 %v1039
          %v1172 = vpop.f32.mrb[0].mxu0
          %v1173 = vadd.f32 0.0, %v1172
          %v1174 = vpop.f32.mrb[0].mxu0
          %1175 = vmatprep.mubr.f32.mxu0 0.0
          %1176 = vmatmul.mubr.f32.gmra.mrb[0].mxu0 %v1042
          %v1177 = vpop.f32.mrb[0].mxu0
          %v1178 = vadd.f32 0.0, %v1177
          %v1179 = vpop.f32.mrb[0].mxu0
          %1180 = vmatprep.mubr.f32.mxu0 0.0
          %1181 = vmatmul.mubr.f32.gmra.mrb[0].mxu0 %v1045
          %v1182 = vpop.f32.mrb[0].mxu0
          %v1183 = vadd.f32 0.0, %v1182
          %v1184 = vpop.f32.mrb[0].mxu0
          %1185 = vmatprep.mubr.f32.mxu0 0.0
          %1186 = vmatmul.mubr.f32.gmra.mrb[0].mxu0 %v1048
          %v1187 = vpop.f32.mrb[0].mxu0
          %v1188 = vadd.f32 0.0, %v1187
          %v1189 = vpop.f32.mrb[0].mxu0
          %1190 = vmatprep.mubr.f32.mxu0 0.0
          %1191 = vmatmul.mubr.f32.gmra.mrb[0].mxu0 %v1051
          %v1192 = vpop.f32.mrb[0].mxu0
          %v1193 = vadd.f32 0.0, %v1192
          %v1194 = vpop.f32.mrb[0].mxu0
          %1195 = vmatprep.mubr.f32.mxu0 0.0
          %1196 = vmatmul.mubr.f32.gmra.mrb[0].mxu0 %v1054
          %v1197 = vpop.f32.mrb[0].mxu0
          %v1198 = vadd.f32 0.0, %v1197
          %v1199 = vpop.f32.mrb[0].mxu0
          %1200 = vdwg.mxu0
          %v1202 = vsel %vm710, %v988, 0
          %v1205 = vsel %vm710, %v989, 0
          %v1208 = vsel %vm710, %v990, 0
          %v1211 = vsel %vm710, %v991, 0
          %v1214 = vsel %vm710, %v992, 0
          %v1217 = vsel %vm710, %v993, 0
          %v1220 = vsel %vm710, %v994, 0
          %v1223 = vsel %vm710, %v995, 0
          %v1226 = vsel %vm710, %v996, 0
          %v1229 = vsel %vm710, %v997, 0
          %v1232 = vsel %vm710, %v998, 0
          %v1235 = vsel %vm710, %v999, 0
          %v1238 = vsel %vm710, %v1000, 0
          %v1241 = vsel %vm710, %v1001, 0
          %v1244 = vsel %vm710, %v1002, 0
          %v1247 = vsel %vm710, %v1003, 0
          %1249 = vmatprep.subr.mxu0 0.0
          %1250 = vmatpush1.msra.mxu0 %v1004
          %1251 = vmatprep.subr.mxu0 0.0
          %1252 = vmatpush1.msra.mxu0 %v1005
          %1253 = vmatprep.subr.mxu0 0.0
          %1254 = vmatpush1.msra.mxu0 0.0
          %1255 = vmatprep.subr.mxu0 0.0
          %1256 = vmatpush1.msra.mxu0 0.0
          %1257 = vmatprep.subr.mxu0 0.0
          %1258 = vmatpush1.msra.mxu0 0.0
          %1259 = vmatprep.subr.mxu0 0.0
          %1260 = vmatpush1.msra.mxu0 0.0
          %1261 = vmatprep.subr.mxu0 0.0
          %1262 = vmatpush1.msra.mxu0 0.0
          %1263 = vmatprep.subr.mxu0 0.0
          %1264 = vmatpush1.msra.mxu0 0.0
          %1265 = vmatprep.subr.mxu0 0.0
          %1266 = vmatpush1.msra.mxu0 0.0
          %1267 = vmatprep.subr.mxu0 0.0
          %1268 = vmatpush1.msra.mxu0 0.0
          %1269 = vmatprep.subr.mxu0 0.0
          %1270 = vmatpush1.msra.mxu0 0.0
          %1271 = vmatprep.subr.mxu0 0.0
          %1272 = vmatpush1.msra.mxu0 0.0
          %1273 = vmatprep.subr.mxu0 0.0
          %1274 = vmatpush1.msra.mxu0 0.0
          %1275 = vmatprep.subr.mxu0 0.0
          %1276 = vmatpush1.msra.mxu0 0.0
          %1277 = vmatprep.subr.mxu0 0.0
          %1278 = vmatpush1.msra.mxu0 0.0
          %1279 = vmatprep.subr.mxu0 0.0
          %1280 = vmatpush1.msra.mxu0 0.0
          %1281 = vmatprep.subr.mxu0 0.0
          %1282 = vmatpush1.msra.mxu0 0.0
          %1283 = vmatprep.subr.mxu0 0.0
          %1284 = vmatpush1.msra.mxu0 0.0
          %1285 = vmatprep.subr.mxu0 0.0
          %1286 = vmatpush1.msra.mxu0 0.0
          %1287 = vmatprep.subr.mxu0 0.0
          %1288 = vmatpush1.msra.mxu0 0.0
          %1289 = vmatprep.subr.mxu0 0.0
          %1290 = vmatpush1.msra.mxu0 0.0
          %1291 = vmatprep.subr.mxu0 0.0
          %1292 = vmatpush1.msra.mxu0 0.0
          %1293 = vmatprep.subr.mxu0 0.0
          %1294 = vmatpush1.msra.mxu0 0.0
          %1295 = vmatprep.subr.mxu0 0.0
          %1296 = vmatpush1.msra.mxu0 0.0
          %1297 = vmatprep.subr.mxu0 0.0
          %1298 = vmatpush1.msra.mxu0 0.0
          %1299 = vmatprep.subr.mxu0 0.0
          %1300 = vmatpush1.msra.mxu0 0.0
          %1301 = vmatprep.subr.mxu0 0.0
          %1302 = vmatpush1.msra.mxu0 0.0
          %1303 = vmatprep.subr.mxu0 0.0
          %1304 = vmatpush1.msra.mxu0 0.0
          %1305 = vmatprep.subr.mxu0 0.0
          %1306 = vmatpush1.msra.mxu0 0.0
          %1307 = vmatprep.subr.mxu0 0.0
          %1308 = vmatpush1.msra.mxu0 0.0
          %1309 = vmatprep.subr.mxu0 0.0
          %1310 = vmatpush1.msra.mxu0 0.0
          %1311 = vmatprep.subr.mxu0 0.0
          %1312 = vmatpush1.msra.mxu0 0.0
          %1313 = vmatprep.mubr.f32.mxu0 0.0
          %1314 = vmatmul.mubr.f32.gmra.mrb[0].mxu0 %v1202
          %v1315 = vpop.f32.mrb[0].mxu0
          %v1316 = vadd.f32 %v1123, %v1315
          %v1317 = vpop.f32.mrb[0].mxu0
          %1318 = vmatprep.mubr.f32.mxu0 0.0
          %1319 = vmatmul.mubr.f32.gmra.mrb[0].mxu0 %v1205
          %v1320 = vpop.f32.mrb[0].mxu0
          %v1321 = vadd.f32 %v1128, %v1320
          %v1322 = vpop.f32.mrb[0].mxu0
          %1323 = vmatprep.mubr.f32.mxu0 0.0
          %1324 = vmatmul.mubr.f32.gmra.mrb[0].mxu0 %v1208
          %v1325 = vpop.f32.mrb[0].mxu0
          %v1326 = vadd.f32 %v1133, %v1325
          %v1327 = vpop.f32.mrb[0].mxu0
          %1328 = vmatprep.mubr.f32.mxu0 0.0
          %1329 = vmatmul.mubr.f32.gmra.mrb[0].mxu0 %v1211
          %v1330 = vpop.f32.mrb[0].mxu0
          %v1331 = vadd.f32 %v1138, %v1330
          %v1332 = vpop.f32.mrb[0].mxu0
          %1333 = vmatprep.mubr.f32.mxu0 0.0
          %1334 = vmatmul.mubr.f32.gmra.mrb[0].mxu0 %v1214
          %v1335 = vpop.f32.mrb[0].mxu0
          %v1336 = vadd.f32 %v1143, %v1335
          %v1337 = vpop.f32.mrb[0].mxu0
          %1338 = vmatprep.mubr.f32.mxu0 0.0
          %1339 = vmatmul.mubr.f32.gmra.mrb[0].mxu0 %v1217
          %v1340 = vpop.f32.mrb[0].mxu0
          %v1341 = vadd.f32 %v1148, %v1340
          %v1342 = vpop.f32.mrb[0].mxu0
          %1343 = vmatprep.mubr.f32.mxu0 0.0
          %1344 = vmatmul.mubr.f32.gmra.mrb[0].mxu0 %v1220
          %v1345 = vpop.f32.mrb[0].mxu0
          %v1346 = vadd.f32 %v1153, %v1345
          %v1347 = vpop.f32.mrb[0].mxu0
          %1348 = vmatprep.mubr.f32.mxu0 0.0
          %1349 = vmatmul.mubr.f32.gmra.mrb[0].mxu0 %v1223
          %v1350 = vpop.f32.mrb[0].mxu0
          %v1351 = vadd.f32 %v1158, %v1350
          %v1352 = vpop.f32.mrb[0].mxu0
          %1353 = vmatprep.mubr.f32.mxu0 0.0
          %1354 = vmatmul.mubr.f32.gmra.mrb[0].mxu0 %v1226
          %v1355 = vpop.f32.mrb[0].mxu0
          %v1356 = vadd.f32 %v1163, %v1355
          %v1357 = vpop.f32.mrb[0].mxu0
          %1358 = vmatprep.mubr.f32.mxu0 0.0
          %1359 = vmatmul.mubr.f32.gmra.mrb[0].mxu0 %v1229
          %v1360 = vpop.f32.mrb[0].mxu0
          %v1361 = vadd.f32 %v1168, %v1360
          %v1362 = vpop.f32.mrb[0].mxu0
          %1363 = vmatprep.mubr.f32.mxu0 0.0
          %1364 = vmatmul.mubr.f32.gmra.mrb[0].mxu0 %v1232
          %v1365 = vpop.f32.mrb[0].mxu0
          %v1366 = vadd.f32 %v1173, %v1365
          %v1367 = vpop.f32.mrb[0].mxu0
          %1368 = vmatprep.mubr.f32.mxu0 0.0
          %1369 = vmatmul.mubr.f32.gmra.mrb[0].mxu0 %v1235
          %v1370 = vpop.f32.mrb[0].mxu0
          %v1371 = vadd.f32 %v1178, %v1370
          %v1372 = vpop.f32.mrb[0].mxu0
          %1373 = vmatprep.mubr.f32.mxu0 0.0
          %1374 = vmatmul.mubr.f32.gmra.mrb[0].mxu0 %v1238
          %v1375 = vpop.f32.mrb[0].mxu0
          %v1376 = vadd.f32 %v1183, %v1375
          %v1377 = vpop.f32.mrb[0].mxu0
          %1378 = vmatprep.mubr.f32.mxu0 0.0
          %1379 = vmatmul.mubr.f32.gmra.mrb[0].mxu0 %v1241
          %v1380 = vpop.f32.mrb[0].mxu0
          %v1381 = vadd.f32 %v1188, %v1380
          %v1382 = vpop.f32.mrb[0].mxu0
          %1383 = vmatprep.mubr.f32.mxu0 0.0
          %1384 = vmatmul.mubr.f32.gmra.mrb[0].mxu0 %v1244
          %v1385 = vpop.f32.mrb[0].mxu0
          %v1386 = vadd.f32 %v1193, %v1385
          %v1387 = vpop.f32.mrb[0].mxu0
          %1388 = vmatprep.mubr.f32.mxu0 0.0
          %1389 = vmatmul.mubr.f32.gmra.mrb[0].mxu0 %v1247
          %v1390 = vpop.f32.mrb[0].mxu0
          %v1391 = vadd.f32 %v1198, %v1390
          %v1392 = vpop.f32.mrb[0].mxu0
          %1393 = vdwg.mxu0
          %v1394 = vld [vmem:[%s5] sm:$0x1]
          %v1396 = vlaneseq
          %v1397 = vshrl.u32 %v1396, 7
          %v1398 = vsub.s32 0, %v1397
          %v1399 = vrot.slane %v1394, %v1398
          %v1401 = vadd.f32 %v1316, %v1399
          %v1402 = vadd.f32 %v1321, %v1399
          %v1403 = vadd.f32 %v1326, %v1399
          %v1404 = vadd.f32 %v1331, %v1399
          %v1405 = vadd.f32 %v1336, %v1399
          %v1406 = vadd.f32 %v1341, %v1399
          %v1407 = vadd.f32 %v1346, %v1399
          %v1408 = vadd.f32 %v1351, %v1399
          %v1409 = vadd.f32 %v1356, %v1399
          %v1410 = vadd.f32 %v1361, %v1399
          %v1411 = vadd.f32 %v1366, %v1399
          %v1412 = vadd.f32 %v1371, %v1399
          %v1413 = vadd.f32 %v1376, %v1399
          %v1414 = vadd.f32 %v1381, %v1399
          %v1415 = vadd.f32 %v1386, %v1399
          %v1416 = vadd.f32 %v1391, %v1399
          %1417 = vst [vmem:[%s399] sm:$0xff] %v1401
          %1418 = vst [vmem:[%s399 + $0x8] sm:$0xff] %v1402
          %1419 = vst [vmem:[%s399 + $0x10] sm:$0xff] %v1403
          %1420 = vst [vmem:[%s399 + $0x18] sm:$0xff] %v1404
          %1421 = vst [vmem:[%s399 + $0x20] sm:$0xff] %v1405
          %1422 = vst [vmem:[%s399 + $0x28] sm:$0xff] %v1406
          %1423 = vst [vmem:[%s399 + $0x30] sm:$0xff] %v1407
          %1424 = vst [vmem:[%s399 + $0x38] sm:$0xff] %v1408
          %1425 = vst [vmem:[%s399 + $0x40] sm:$0xff] %v1409
          %1426 = vst [vmem:[%s399 + $0x48] sm:$0xff] %v1410
          %1427 = vst [vmem:[%s399 + $0x50] sm:$0xff] %v1411
          %1428 = vst [vmem:[%s399 + $0x58] sm:$0xff] %v1412
          %1429 = vst [vmem:[%s399 + $0x60] sm:$0xff] %v1413
          %1430 = vst [vmem:[%s399 + $0x68] sm:$0xff] %v1414
          %1431 = vst [vmem:[%s399 + $0x70] sm:$0xff] %v1415
          %1432 = vst [vmem:[%s399 + $0x78] sm:$0xff] %v1416
        $region93: #{tpu_custom_call.1} parent=80 // pred_fallthru
          _
        %s1433 = sand.u32 %s183, 1
        %s1434 = scalar_lea.sflag [#allocation6], %s1433
        %s1435 = sand.u32 %s183, 1
        %s1436 = smul.addr %s1435, 128
        %s1437 = scalar_lea.vmem [#allocation5], %s1436
        // Predicated region
        $region94: #{tpu_custom_call.1} parent=80 // pred_check
          %p1438 = pneg %p193
        $region95: #{tpu_custom_call.1} parent=80 // pred_check_branch
          %1440 = sbr.rel (%p1438) target = $region97
        $region96: #{tpu_custom_call.1} parent=80 // pred_region
          %s1441 = smul.u32 16, %s24
          %s1443 = ssub.s32 2048, 2048
          %1444 = vsyncadd %s1434, %s1443
          %s1445 = smul.addr %s1441, 128
          %s1446 = scalar_lea.hbm %s6, %s1445
          %s1447 = sshll.u32 %s1437, 4
          %s1448 = int_to_ptr.vmem [resolvable:$true] %s1447
          %1453 = dma.vmem_to_hbm [thread:$0]  %s1448, 2048, %s1446, %s1434, 128, 128, 8
        $region97: #{tpu_custom_call.1} parent=80 // pred_fallthru
          _
      $region81: #{tpu_custom_call.1} parent=5 // pred_fallthru
        _
      %p1454 = scmp.le.s32.totalorder 2, %s15
      // Predicated region
      $region98: #{tpu_custom_call.1} parent=5 // pred_check
        %p1455 = pneg %p1454
      $region99: #{tpu_custom_call.1} parent=5 // pred_check_branch
        %1457 = sbr.rel (%p1455) target = $region101
      $region100: #{tpu_custom_call.1} parent=5 // pred_region
        %s1458 = ssub.s32 %s15, 2
        // Predicated region
        $region102: #{tpu_custom_call.1} parent=100 // pred_check
          %p1459 = pneg %p199
        $region103: #{tpu_custom_call.1} parent=100 // pred_check_branch
          %1461 = sbr.rel (%p1459) target = $region105
        $region104: #{tpu_custom_call.1} parent=100 // pred_region
          %s1462 = sand.u32 %s184, 1
          %s1463 = scalar_lea.sflag [#allocation6], %s1462
          %s1464 = sand.u32 %s184, 1
          %s1465 = smul.addr %s1464, 128
          %s1466 = scalar_lea.vmem [#allocation5], %s1465
          %1467 = dma.done %s1463, 2048
        $region105: #{tpu_custom_call.1} parent=100 // pred_fallthru
          _
      $region101: #{tpu_custom_call.1} parent=5 // pred_fallthru
        _
    $region6: #{tpu_custom_call.1} parent=1 // loop_footer
      %s19 = sadd.s32 1, %s15
    $region7: #{tpu_custom_call.1} parent=1 // loop_footer_branch
      %14 = sbr.rel target = $region3
    $region8: #{tpu_custom_call.1} parent=1 // loop_exit
      _
    %1468 = vsyncpa [#allocation6], 1
    %s1469 = scalar_lea.sflag [#allocation6], 1
    %1470 = vsyncpa %s1469, 1

</llo_original>
